<compile_context>
chip_gen: v6e
topology: v6e:2x2x1
jax: 0.10.0
libtpu: 0.0.40
codegen_flags: <defaults>
</compile_context>

<pallas_src>
import functools

import jax
import jax.numpy as jnp
from jax.experimental import pallas as pl
from jax.experimental.pallas import tpu as pltpu


# ----------------------------- kernel helpers --------------------------------


def _conv_relu_pool_partial(x_tile, conv_w_t):
    """Pointwise (1x1) conv + ReLU + spatial partial-sum for one spatial tile.

    x_tile:   (N, C, ts) f32, spatial on lanes (lane-dense).
    conv_w_t: (F, C)     f32, transposed 1x1-conv weight.
    Returns per-image partial sums over the tile: (N, F) f32.

    C is tiny (image channels), so the channel contraction is done as C
    unrolled VPU broadcast-FMAs rather than a K=C MXU matmul.
    """
    n, c_dim, ts = x_tile.shape
    # h[n, f, t] = sum_c x[n, c, t] * w[c, f]
    h = x_tile[:, 0, :][:, None, :] * conv_w_t[:, 0:1]          # (N, F, ts)
    for c in range(1, c_dim):                                    # static unroll
        h = h + x_tile[:, c, :][:, None, :] * conv_w_t[:, c:c + 1]
    h = jnp.maximum(h, 0.0)                                      # ReLU
    return jnp.sum(h, axis=-1)                                   # (N, F)


def _linear_bn_epilogue(pooled, linw_ref, linb_ref, gamma_ref, beta_ref,
                        out_ref, eps):
    """pooled: (N, F) f32 global-average-pooled features."""
    feats = jnp.dot(pooled, linw_ref[...],
                    preferred_element_type=jnp.float32) + linb_ref[...]
    # BatchNorm1d, training mode: batch statistics, biased variance.
    mean = jnp.mean(feats, axis=0, keepdims=True)
    var = jnp.mean((feats - mean) ** 2, axis=0, keepdims=True)
    y = (feats - mean) * jax.lax.rsqrt(var + eps)
    out_ref[...] = (gamma_ref[...] * y + beta_ref[...]).astype(out_ref.dtype)


# --------------------------------- kernels ------------------------------------


def encoder_cnn_single_kernel(x_ref, convwt_ref, linw_ref, linb_ref, gamma_ref,
                              beta_ref, out_ref, *, hw, eps):
    """Whole spatial extent in one step: no grid, no accumulator gating."""
    pooled = _conv_relu_pool_partial(x_ref[...], convwt_ref[...]) * (1.0 / hw)
    _linear_bn_epilogue(pooled, linw_ref, linb_ref, gamma_ref, beta_ref,
                        out_ref, eps)


def encoder_cnn_tiled_kernel(x_ref, convwt_ref, linw_ref, linb_ref, gamma_ref,
                             beta_ref, out_ref, acc_ref, *, hw, eps):
    """Grid axis 0 iterates spatial tiles (reduction axis, 'arbitrary')."""
    k = pl.program_id(0)

    # Init the resident (N, F) pooled-feature accumulator on the first step.
    @pl.when(k == 0)
    def _():
        acc_ref[...] = jnp.zeros_like(acc_ref)

    acc_ref[...] += _conv_relu_pool_partial(x_ref[...], convwt_ref[...])

    # Fused epilogue on the last spatial tile: avg-pool -> Linear -> BatchNorm.
    @pl.when(k == pl.num_programs(0) - 1)
    def _():
        _linear_bn_epilogue(acc_ref[...] * (1.0 / hw), linw_ref, linb_ref,
                            gamma_ref, beta_ref, out_ref, eps)


# --------------------------------- wrapper ------------------------------------


def _vmem_limit_bytes():
    # ~3/4 of physical VMEM: ~96 MiB on v5e/v6e (128 MiB), ~48 MiB on v7x (64).
    try:
        cap = pltpu.get_tpu_info().vmem_capacity_bytes
    except Exception:
        cap = 64 << 20
    return int(min(cap * 3 // 4, 100 << 20))


def encoder_cnn_forward(images, conv_w, lin_w, lin_b, bn_gamma, bn_beta,
                        *, spatial_tile=None, eps=1e-5):
    """images: (N, C, H, W) float32 (PyTorch NCHW).  Returns (N, embed) f32."""
    N, C, H, W = images.shape
    HW = H * W
    F = conv_w.shape[1]            # stand-in for resnet.fc.in_features
    E = lin_w.shape[0]             # embed_size

    vmem_limit = _vmem_limit_bytes()

    # ---- spatial tile selection (lane-dense, VMEM-aware) --------------------
    auto = spatial_tile is None
    if auto:
        # Dominant VMEM consumer is the f32 (N, F, ts) activation: keep it to
        # ~1/4 of the VMEM budget, tiles lane-dense (multiple of 128) and as
        # large as possible (>=512 lanes amortizes ~0.35us/step grid overhead).
        per_pos_bytes = max(1, N * F * 4)
        ts_cap = (vmem_limit // 4) // per_pos_bytes
        spatial_tile = max(128, min(1024, (ts_cap // 128) * 128))
    ts = min(spatial_tile, HW)
    if ts < HW:
        ts = min(HW, max(128, (ts // 128) * 128))
    n_tiles = pl.cdiv(HW, ts)
    if auto and n_tiles <= 2:
        ts, n_tiles = HW, 1        # <= 2 grid steps is pure pipeline overhead

    # ---- glue (no transpose, no cast: the image stream is read once) --------
    x3d = images.reshape(N, C, HW).astype(jnp.float32)   # spatial on lanes
    conv_w_t = conv_w.T.astype(jnp.float32)              # (F, C), tiny
    lin_w_t = lin_w.T.astype(jnp.float32)                # (F, E)
    lin_b_2d = lin_b.reshape(1, E).astype(jnp.float32)
    gamma_2d = bn_gamma.reshape(1, E).astype(jnp.float32)
    beta_2d = bn_beta.reshape(1, E).astype(jnp.float32)

    if n_tiles == 1:
        kernel = functools.partial(encoder_cnn_single_kernel,
                                   hw=float(HW), eps=eps)
        return pl.pallas_call(
            kernel,
            out_shape=jax.ShapeDtypeStruct((N, E), jnp.float32),
            compiler_params=pltpu.CompilerParams(vmem_limit_bytes=vmem_limit),
        )(x3d, conv_w_t, lin_w_t, lin_b_2d, gamma_2d, beta_2d)

    # Pad the spatial axis to a tile multiple: zero columns are neutral
    # (ReLU(0 * w) = 0 adds nothing to the sum; we still divide by true H*W).
    HW_pad = n_tiles * ts
    if HW_pad != HW:
        x3d = jnp.pad(x3d, ((0, 0), (0, 0), (0, HW_pad - HW)))

    kernel = functools.partial(encoder_cnn_tiled_kernel, hw=float(HW), eps=eps)
    return pl.pallas_call(
        kernel,
        out_shape=jax.ShapeDtypeStruct((N, E), jnp.float32),
        grid=(n_tiles,),
        in_specs=[
            # x: fresh lane-dense spatial tile each step (auto double-buffered).
            pl.BlockSpec((N, C, ts), lambda k: (0, 0, k)),
            # Weights / BN params: constant block index -> stay VMEM-resident.
            pl.BlockSpec((F, C), lambda k: (0, 0)),
            pl.BlockSpec((F, E), lambda k: (0, 0)),
            pl.BlockSpec((1, E), lambda k: (0, 0)),
            pl.BlockSpec((1, E), lambda k: (0, 0)),
            pl.BlockSpec((1, E), lambda k: (0, 0)),
        ],
        # Output is resident across the reduction axis; written on last step.
        out_specs=pl.BlockSpec((N, E), lambda k: (0, 0)),
        scratch_shapes=[pltpu.VMEM((N, F), jnp.float32)],
        compiler_params=pltpu.CompilerParams(
            dimension_semantics=("arbitrary",),
            vmem_limit_bytes=vmem_limit,
        ),
    )(x3d, conv_w_t, lin_w_t, lin_b_2d, gamma_2d, beta_2d)


# ----------------------------- pure-JAX reference -----------------------------


def encoder_cnn_reference(images, conv_w, lin_w, lin_b, bn_gamma, bn_beta,
                          eps=1e-5):
    N, C, H, W = images.shape
    x = images.reshape(N, C, H * W).astype(jnp.float32)
    h = jnp.maximum(jnp.einsum('ncs,cf->nsf', x, conv_w), 0.0)
    pooled = jnp.mean(h, axis=1)                          # (N, F)
    feats = pooled @ lin_w.T + lin_b
    mean = jnp.mean(feats, axis=0, keepdims=True)
    var = jnp.mean((feats - mean) ** 2, axis=0, keepdims=True)
    return bn_gamma * (feats - mean) * jax.lax.rsqrt(var + eps) + bn_beta


# ----------------------------------- main --------------------------------------


if __name__ == "__main__":
    # Small, deterministic shapes (lane-dense F/E).
    N, C, H, W = 2, 4, 16, 16      # batch, in-channels, spatial
    F = 256                        # stand-in for resnet.fc.in_features (2048)
    E = 128                        # embed_size (multiple of 128)

    key = jax.random.PRNGKey(0)
    k_img, k_conv, k_lin = jax.random.split(key, 3)

    images = jax.random.normal(k_img, (N, C, H, W), dtype=jnp.float32)

    # Deterministic synthetic backbone weight (stand-in for pretrained ResNet).
    conv_w = jax.random.normal(k_conv, (C, F), dtype=jnp.float32) * 0.1

    # self.linear: weight ~ N(0, 0.02), bias = 0   (matches init_weights())
    lin_w = jax.random.normal(k_lin, (E, F), dtype=jnp.float32) * 0.02
    lin_b = jnp.zeros((E,), dtype=jnp.float32)

    # self.bn: default affine init gamma=1, beta=0
    bn_gamma = jnp.ones((E,), dtype=jnp.float32)
    bn_beta = jnp.zeros((E,), dtype=jnp.float32)

    # Auto path: whole 16x16 spatial extent in one step (single-step kernel).
    out = encoder_cnn_forward(images, conv_w, lin_w, lin_b, bn_gamma, bn_beta)
    jax.block_until_ready(out)
    assert out.shape == (N, E) and out.dtype == jnp.float32

    # Tiled / pipelined path (two 128-wide spatial tiles) must agree.
    out_tiled = encoder_cnn_forward(images, conv_w, lin_w, lin_b, bn_gamma,
                                    bn_beta, spatial_tile=128)
    jax.block_until_ready(out_tiled)
    assert out_tiled.shape == (N, E)

    ref = encoder_cnn_reference(images, conv_w, lin_w, lin_b, bn_gamma, bn_beta)
    assert jnp.allclose(out, ref, atol=5e-3, rtol=5e-3)
    assert jnp.allclose(out_tiled, ref, atol=5e-3, rtol=5e-3)

    print("KERNEL_OK")
</pallas_src>

<mosaic_0001>
module attributes {stable_mosaic.version = 11 : i64} {
  func.func @encoder_cnn_single_kernel(%arg0: memref<2x4x256xf32, #tpu.memory_space<vmem>>, %arg1: memref<256x4xf32, #tpu.memory_space<vmem>>, %arg2: memref<256x128xf32, #tpu.memory_space<vmem>>, %arg3: memref<1x128xf32, #tpu.memory_space<vmem>>, %arg4: memref<1x128xf32, #tpu.memory_space<vmem>>, %arg5: memref<1x128xf32, #tpu.memory_space<vmem>>, %arg6: memref<2x128xf32, #tpu.memory_space<vmem>>) attributes {dimension_semantics = [], scalar_prefetch = 0 : i64, scratch_operands = 0 : i64, tpu.core_type = #tpu.core_type<tc>} {
    %c0 = arith.constant 0 : index
    %c0_0 = arith.constant 0 : index
    %c0_1 = arith.constant 0 : index
    %0 = vector.load %arg0[%c0, %c0_0, %c0_1] : memref<2x4x256xf32, #tpu.memory_space<vmem>>, vector<2x4x256xf32>
    %c0_2 = arith.constant 0 : index
    %c0_3 = arith.constant 0 : index
    %1 = vector.load %arg1[%c0_2, %c0_3] : memref<256x4xf32, #tpu.memory_space<vmem>>, vector<256x4xf32>
    %2 = vector.extract_strided_slice %0 {offsets = [0, 0, 0], sizes = [2, 1, 256], strides = [1, 1, 1]} : vector<2x4x256xf32> to vector<2x1x256xf32>
    %3 = vector.shape_cast %2 : vector<2x1x256xf32> to vector<2x256xf32>
    %4 = vector.shape_cast %3 : vector<2x256xf32> to vector<2x1x256xf32>
    %5 = vector.extract_strided_slice %1 {offsets = [0, 0], sizes = [256, 1], strides = [1, 1]} : vector<256x4xf32> to vector<256x1xf32>
    %6 = vector.shape_cast %5 : vector<256x1xf32> to vector<1x256x1xf32>
    %7 = vector.broadcast %4 : vector<2x1x256xf32> to vector<2x256x256xf32>
    %8 = vector.broadcast %6 : vector<1x256x1xf32> to vector<2x256x256xf32>
    %9 = arith.mulf %7, %8 : vector<2x256x256xf32>
    %10 = vector.extract_strided_slice %0 {offsets = [0, 1, 0], sizes = [2, 1, 256], strides = [1, 1, 1]} : vector<2x4x256xf32> to vector<2x1x256xf32>
    %11 = vector.shape_cast %10 : vector<2x1x256xf32> to vector<2x256xf32>
    %12 = vector.shape_cast %11 : vector<2x256xf32> to vector<2x1x256xf32>
    %13 = vector.extract_strided_slice %1 {offsets = [0, 1], sizes = [256, 1], strides = [1, 1]} : vector<256x4xf32> to vector<256x1xf32>
    %14 = vector.shape_cast %13 : vector<256x1xf32> to vector<1x256x1xf32>
    %15 = vector.broadcast %12 : vector<2x1x256xf32> to vector<2x256x256xf32>
    %16 = vector.broadcast %14 : vector<1x256x1xf32> to vector<2x256x256xf32>
    %17 = arith.mulf %15, %16 : vector<2x256x256xf32>
    %18 = arith.addf %9, %17 : vector<2x256x256xf32>
    %19 = vector.extract_strided_slice %0 {offsets = [0, 2, 0], sizes = [2, 1, 256], strides = [1, 1, 1]} : vector<2x4x256xf32> to vector<2x1x256xf32>
    %20 = vector.shape_cast %19 : vector<2x1x256xf32> to vector<2x256xf32>
    %21 = vector.shape_cast %20 : vector<2x256xf32> to vector<2x1x256xf32>
    %22 = vector.extract_strided_slice %1 {offsets = [0, 2], sizes = [256, 1], strides = [1, 1]} : vector<256x4xf32> to vector<256x1xf32>
    %23 = vector.shape_cast %22 : vector<256x1xf32> to vector<1x256x1xf32>
    %24 = vector.broadcast %21 : vector<2x1x256xf32> to vector<2x256x256xf32>
    %25 = vector.broadcast %23 : vector<1x256x1xf32> to vector<2x256x256xf32>
    %26 = arith.mulf %24, %25 : vector<2x256x256xf32>
    %27 = arith.addf %18, %26 : vector<2x256x256xf32>
    %28 = vector.extract_strided_slice %0 {offsets = [0, 3, 0], sizes = [2, 1, 256], strides = [1, 1, 1]} : vector<2x4x256xf32> to vector<2x1x256xf32>
    %29 = vector.shape_cast %28 : vector<2x1x256xf32> to vector<2x256xf32>
    %30 = vector.shape_cast %29 : vector<2x256xf32> to vector<2x1x256xf32>
    %31 = vector.extract_strided_slice %1 {offsets = [0, 3], sizes = [256, 1], strides = [1, 1]} : vector<256x4xf32> to vector<256x1xf32>
    %32 = vector.shape_cast %31 : vector<256x1xf32> to vector<1x256x1xf32>
    %33 = vector.broadcast %30 : vector<2x1x256xf32> to vector<2x256x256xf32>
    %34 = vector.broadcast %32 : vector<1x256x1xf32> to vector<2x256x256xf32>
    %35 = arith.mulf %33, %34 : vector<2x256x256xf32>
    %36 = arith.addf %27, %35 : vector<2x256x256xf32>
    %cst = arith.constant 0.000000e+00 : f32
    %37 = vector.broadcast %cst : f32 to vector<2x256x256xf32>
    %38 = arith.maximumf %36, %37 : vector<2x256x256xf32>
    %cst_4 = arith.constant dense<0.000000e+00> : vector<2x256xf32>
    %39 = vector.multi_reduction <add>, %38, %cst_4 [2] : vector<2x256x256xf32> to vector<2x256xf32>
    %cst_5 = arith.constant 3.906250e-03 : f32
    %40 = vector.broadcast %cst_5 : f32 to vector<2x256xf32>
    %41 = arith.mulf %39, %40 : vector<2x256xf32>
    %c0_6 = arith.constant 0 : index
    %c0_7 = arith.constant 0 : index
    %42 = vector.load %arg2[%c0_6, %c0_7] : memref<256x128xf32, #tpu.memory_space<vmem>>, vector<256x128xf32>
    %cst_8 = arith.constant dense<0.000000e+00> : vector<2x128xf32>
    %43 = tpu.matmul %41, %42, %cst_8 {dimension_numbers = #tpu.dot_dimension_numbers<[1], [0], [0], [1], [0, 0, 1, 1], [], []>} : vector<2x256xf32>, vector<256x128xf32>, vector<2x128xf32> -> vector<2x128xf32>
    %c0_9 = arith.constant 0 : index
    %c0_10 = arith.constant 0 : index
    %44 = vector.load %arg3[%c0_9, %c0_10] : memref<1x128xf32, #tpu.memory_space<vmem>>, vector<1x128xf32>
    %45 = vector.broadcast %44 : vector<1x128xf32> to vector<2x128xf32>
    %46 = arith.addf %43, %45 : vector<2x128xf32>
    %cst_11 = arith.constant dense<0.000000e+00> : vector<128xf32>
    %47 = vector.multi_reduction <add>, %46, %cst_11 [0] : vector<2x128xf32> to vector<128xf32>
    %48 = vector.shape_cast %47 : vector<128xf32> to vector<1x128xf32>
    %cst_12 = arith.constant 2.000000e+00 : f32
    %49 = vector.broadcast %cst_12 : f32 to vector<1x128xf32>
    %50 = arith.divf %48, %49 : vector<1x128xf32>
    %51 = vector.broadcast %50 : vector<1x128xf32> to vector<2x128xf32>
    %52 = arith.subf %46, %51 : vector<2x128xf32>
    %53 = arith.mulf %52, %52 : vector<2x128xf32>
    %cst_13 = arith.constant dense<0.000000e+00> : vector<128xf32>
    %54 = vector.multi_reduction <add>, %53, %cst_13 [0] : vector<2x128xf32> to vector<128xf32>
    %55 = vector.shape_cast %54 : vector<128xf32> to vector<1x128xf32>
    %cst_14 = arith.constant 2.000000e+00 : f32
    %56 = vector.broadcast %cst_14 : f32 to vector<1x128xf32>
    %57 = arith.divf %55, %56 : vector<1x128xf32>
    %58 = vector.broadcast %50 : vector<1x128xf32> to vector<2x128xf32>
    %59 = arith.subf %46, %58 : vector<2x128xf32>
    %cst_15 = arith.constant 9.99999974E-6 : f32
    %60 = vector.broadcast %cst_15 : f32 to vector<1x128xf32>
    %61 = arith.addf %57, %60 : vector<1x128xf32>
    %62 = math.rsqrt %61 : vector<1x128xf32>
    %63 = vector.broadcast %62 : vector<1x128xf32> to vector<2x128xf32>
    %64 = arith.mulf %59, %63 : vector<2x128xf32>
    %c0_16 = arith.constant 0 : index
    %c0_17 = arith.constant 0 : index
    %65 = vector.load %arg4[%c0_16, %c0_17] : memref<1x128xf32, #tpu.memory_space<vmem>>, vector<1x128xf32>
    %66 = vector.broadcast %65 : vector<1x128xf32> to vector<2x128xf32>
    %67 = arith.mulf %66, %64 : vector<2x128xf32>
    %c0_18 = arith.constant 0 : index
    %c0_19 = arith.constant 0 : index
    %68 = vector.load %arg5[%c0_18, %c0_19] : memref<1x128xf32, #tpu.memory_space<vmem>>, vector<1x128xf32>
    %69 = vector.broadcast %68 : vector<1x128xf32> to vector<2x128xf32>
    %70 = arith.addf %67, %69 : vector<2x128xf32>
    %c0_20 = arith.constant 0 : index
    %c0_21 = arith.constant 0 : index
    %71 = vector.load %arg6[%c0_20, %c0_21] : memref<2x128xf32, #tpu.memory_space<vmem>>, vector<2x128xf32>
    tpu.vector_store %arg6[%c0_20, %c0_21], %70 {strides = array<i32>} : memref<2x128xf32, #tpu.memory_space<vmem>>, vector<2x128xf32>,
    return
  }
}

</mosaic_0001>

<llo_original>
// kernel: tpu_custom_call.1
$region0: #{tpu_custom_call.1}
  #allocation0 [shape = 'u32[]', space=smem, size = 0x4, offset = 0x4, fixed_abs, tag = 'smem constant byte address 0x4 - core index']
  #allocation1 [shape = 'u32[144,128]{1,0:T(1,128)}', space=vmem, size = 0x12000, scoped, tag = 'internal scratch']
  %s0 = inlined_call_operand.hbm [shape: f32[2,4,256], index: 0, kind: input, shape index: {}]
  %s1 = inlined_call_operand.vmem [shape: f32[256,4], index: 1, kind: input, shape index: {}]
  %s2 = inlined_call_operand.vmem [shape: f32[256,128], index: 2, kind: input, shape index: {}]
  %s3 = inlined_call_operand.vmem [shape: f32[1,128], index: 3, kind: input, shape index: {}]
  %s4 = inlined_call_operand.vmem [shape: f32[1,128], index: 4, kind: input, shape index: {}]
  %s5 = inlined_call_operand.vmem [shape: f32[1,128], index: 5, kind: input, shape index: {}]
  %s6 = inlined_call_operand.hbm [shape: f32[2,128], index: 6, kind: output, shape index: {}]
  %s7 = sld [smem:[#allocation0]]
  $region38: #{tpu_custom_call.1} parent=0
    _
  %s9 = ssub.s32 1, %s7
  %s10 = scalar_select 0, %s9, %s7
  $region1: #{tpu_custom_call.1} parent=0
    #allocation2 [shape = 'u8[8192]{0}', space=vmem, size = 0x2000, scoped, tag = 'input window, operand 0, single buffered']
    #allocation3 [shape = 's32[1]{0}', space=sflag, size = 0x4, scoped, tag = 'scoped memory for tpu_custom_call.1']
    #allocation4 [shape = 's32[1]{0}', space=sflag, size = 0x4, scoped, tag = 'scoped memory for tpu_custom_call.1']
    #allocation5 [shape = 'u8[1024]{0}', space=vmem, size = 0x400, scoped, tag = 'output window, operand 0, single buffered']
    %11 = vsyncpa [#allocation3], 0
    %12 = vsyncpa [#allocation4], 0
    // Predicated region
    $region2: #{tpu_custom_call.1} parent=1 // pred_check
      _
    $region3: #{tpu_custom_call.1} parent=1 // pred_check_branch
      %14 = sbr.rel (0) target = $region5
    $region4: #{tpu_custom_call.1} parent=1 // pred_region
      %s16 = ssub.s32 256, 256
      %17 = vsyncadd [#allocation3], %s16
      %s18 = sshll.u32 [#allocation2], 4
      %s19 = int_to_ptr.vmem [resolvable:$true] %s18
      %24 = dma.hbm_to_vmem [thread:$0]  %s0, 256, %s19, [#allocation3], 128, 128, 8
    $region5: #{tpu_custom_call.1} parent=1 // pred_fallthru
      _
    // Predicated region
    $region6: #{tpu_custom_call.1} parent=1 // pred_check
      _
    $region7: #{tpu_custom_call.1} parent=1 // pred_check_branch
      %26 = sbr.rel (0) target = $region9
    $region8: #{tpu_custom_call.1} parent=1 // pred_region
      _
    $region9: #{tpu_custom_call.1} parent=1 // pred_fallthru
      _
    // Predicated region
    $region10: #{tpu_custom_call.1} parent=1 // pred_check
      _
    $region11: #{tpu_custom_call.1} parent=1 // pred_check_branch
      %28 = sbr.rel (0) target = $region13
    $region12: #{tpu_custom_call.1} parent=1 // pred_region
      _
    $region13: #{tpu_custom_call.1} parent=1 // pred_fallthru
      _
    // Predicated region
    $region14: #{tpu_custom_call.1} parent=1 // pred_check
      _
    $region15: #{tpu_custom_call.1} parent=1 // pred_check_branch
      %30 = sbr.rel (0) target = $region17
    $region16: #{tpu_custom_call.1} parent=1 // pred_region
      _
    $region17: #{tpu_custom_call.1} parent=1 // pred_fallthru
      _
    // Predicated region
    $region18: #{tpu_custom_call.1} parent=1 // pred_check
      _
    $region19: #{tpu_custom_call.1} parent=1 // pred_check_branch
      %32 = sbr.rel (0) target = $region21
    $region20: #{tpu_custom_call.1} parent=1 // pred_region
      _
    $region21: #{tpu_custom_call.1} parent=1 // pred_fallthru
      _
    // Predicated region
    $region22: #{tpu_custom_call.1} parent=1 // pred_check
      _
    $region23: #{tpu_custom_call.1} parent=1 // pred_check_branch
      %34 = sbr.rel (0) target = $region25
    $region24: #{tpu_custom_call.1} parent=1 // pred_region
      _
    $region25: #{tpu_custom_call.1} parent=1 // pred_fallthru
      _
    // Predicated region
    $region26: #{tpu_custom_call.1} parent=1 // pred_check
      _
    $region27: #{tpu_custom_call.1} parent=1 // pred_check_branch
      %36 = sbr.rel (0) target = $region29
    $region28: #{tpu_custom_call.1} parent=1 // pred_region
      %37 = dma.done [#allocation3], 256
    $region29: #{tpu_custom_call.1} parent=1 // pred_fallthru
      _
    %v38 = vld [vmem:[#allocation2] sm:$0xff]
    %v39 = vld [vmem:[#allocation2 + $0x8] sm:$0xff]
    %v40 = vld [vmem:[%s1] sm:$0xff]
    %v41 = vld [vmem:[%s1 + $0x8] sm:$0xff]
    %v42 = vld [vmem:[%s1 + $0x10] sm:$0xff]
    %v43 = vld [vmem:[%s1 + $0x18] sm:$0xff]
    %v44 = vld [vmem:[%s1 + $0x20] sm:$0xff]
    %v45 = vld [vmem:[%s1 + $0x28] sm:$0xff]
    %v46 = vld [vmem:[%s1 + $0x30] sm:$0xff]
    %v47 = vld [vmem:[%s1 + $0x38] sm:$0xff]
    %v48 = vld [vmem:[%s1 + $0x40] sm:$0xff]
    %v49 = vld [vmem:[%s1 + $0x48] sm:$0xff]
    %v50 = vld [vmem:[%s1 + $0x50] sm:$0xff]
    %v51 = vld [vmem:[%s1 + $0x58] sm:$0xff]
    %v52 = vld [vmem:[%s1 + $0x60] sm:$0xff]
    %v53 = vld [vmem:[%s1 + $0x68] sm:$0xff]
    %v54 = vld [vmem:[%s1 + $0x70] sm:$0xff]
    %v55 = vld [vmem:[%s1 + $0x78] sm:$0xff]
    %v56 = vld [vmem:[%s1 + $0x80] sm:$0xff]
    %v57 = vld [vmem:[%s1 + $0x88] sm:$0xff]
    %v58 = vld [vmem:[%s1 + $0x90] sm:$0xff]
    %v59 = vld [vmem:[%s1 + $0x98] sm:$0xff]
    %v60 = vld [vmem:[%s1 + $0xa0] sm:$0xff]
    %v61 = vld [vmem:[%s1 + $0xa8] sm:$0xff]
    %v62 = vld [vmem:[%s1 + $0xb0] sm:$0xff]
    %v63 = vld [vmem:[%s1 + $0xb8] sm:$0xff]
    %v64 = vld [vmem:[%s1 + $0xc0] sm:$0xff]
    %v65 = vld [vmem:[%s1 + $0xc8] sm:$0xff]
    %v66 = vld [vmem:[%s1 + $0xd0] sm:$0xff]
    %v67 = vld [vmem:[%s1 + $0xd8] sm:$0xff]
    %v68 = vld [vmem:[%s1 + $0xe0] sm:$0xff]
    %v69 = vld [vmem:[%s1 + $0xe8] sm:$0xff]
    %v70 = vld [vmem:[%s1 + $0xf0] sm:$0xff]
    %v71 = vld [vmem:[%s1 + $0xf8] sm:$0xff]
    %v74 = vlaneseq
    %v75 = vshrl.u32 %v74, 7
    %v76 = vsub.s32 0, %v75
    %v77 = vrot.slane %v38, %v76
    %v78 = vlaneseq
    %v79 = vshrl.u32 %v78, 7
    %v80 = vsub.s32 4, %v79
    %v81 = vrot.slane %v38, %v80
    %v82 = vlaneseq
    %v83 = vshrl.u32 %v82, 7
    %v84 = vsub.s32 0, %v83
    %v85 = vrot.slane %v39, %v84
    %v86 = vlaneseq
    %v87 = vshrl.u32 %v86, 7
    %v88 = vsub.s32 4, %v87
    %v89 = vrot.slane %v39, %v88
    %v94 = vlaneseq
    %v95 = vshrl.u32 %v94, 7
    %v96 = vsub.s32 0, %v95
    %v97 = vrot.slane %v77, %v96
    %v98 = vlaneseq
    %v99 = vshrl.u32 %v98, 7
    %v100 = vsub.s32 0, %v99
    %v101 = vrot.slane %v81, %v100
    %v102 = vlaneseq
    %v103 = vshrl.u32 %v102, 7
    %v104 = vsub.s32 0, %v103
    %v105 = vrot.slane %v85, %v104
    %v106 = vlaneseq
    %v107 = vshrl.u32 %v106, 7
    %v108 = vsub.s32 0, %v107
    %v109 = vrot.slane %v89, %v108
    %111 = vset.pattern.permute.xlu0 0
    %112 = vperm.xlu0 %111, %v40
    %v113 = vpop.permute.xlu0 %112
    %116 = vset.pattern.permute.xlu0 0
    %117 = vperm.xlu0 %116, %v41
    %v118 = vpop.permute.xlu0 %117
    %121 = vset.pattern.permute.xlu0 0
    %122 = vperm.xlu0 %121, %v42
    %v123 = vpop.permute.xlu0 %122
    %126 = vset.pattern.permute.xlu0 0
    %127 = vperm.xlu0 %126, %v43
    %v128 = vpop.permute.xlu0 %127
    %131 = vset.pattern.permute.xlu0 0
    %132 = vperm.xlu0 %131, %v44
    %v133 = vpop.permute.xlu0 %132
    %136 = vset.pattern.permute.xlu0 0
    %137 = vperm.xlu0 %136, %v45
    %v138 = vpop.permute.xlu0 %137
    %141 = vset.pattern.permute.xlu0 0
    %142 = vperm.xlu0 %141, %v46
    %v143 = vpop.permute.xlu0 %142
    %146 = vset.pattern.permute.xlu0 0
    %147 = vperm.xlu0 %146, %v47
    %v148 = vpop.permute.xlu0 %147
    %151 = vset.pattern.permute.xlu0 0
    %152 = vperm.xlu0 %151, %v48
    %v153 = vpop.permute.xlu0 %152
    %156 = vset.pattern.permute.xlu0 0
    %157 = vperm.xlu0 %156, %v49
    %v158 = vpop.permute.xlu0 %157
    %161 = vset.pattern.permute.xlu0 0
    %162 = vperm.xlu0 %161, %v50
    %v163 = vpop.permute.xlu0 %162
    %166 = vset.pattern.permute.xlu0 0
    %167 = vperm.xlu0 %166, %v51
    %v168 = vpop.permute.xlu0 %167
    %171 = vset.pattern.permute.xlu0 0
    %172 = vperm.xlu0 %171, %v52
    %v173 = vpop.permute.xlu0 %172
    %176 = vset.pattern.permute.xlu0 0
    %177 = vperm.xlu0 %176, %v53
    %v178 = vpop.permute.xlu0 %177
    %181 = vset.pattern.permute.xlu0 0
    %182 = vperm.xlu0 %181, %v54
    %v183 = vpop.permute.xlu0 %182
    %186 = vset.pattern.permute.xlu0 0
    %187 = vperm.xlu0 %186, %v55
    %v188 = vpop.permute.xlu0 %187
    %191 = vset.pattern.permute.xlu0 0
    %192 = vperm.xlu0 %191, %v56
    %v193 = vpop.permute.xlu0 %192
    %196 = vset.pattern.permute.xlu0 0
    %197 = vperm.xlu0 %196, %v57
    %v198 = vpop.permute.xlu0 %197
    %201 = vset.pattern.permute.xlu0 0
    %202 = vperm.xlu0 %201, %v58
    %v203 = vpop.permute.xlu0 %202
    %206 = vset.pattern.permute.xlu0 0
    %207 = vperm.xlu0 %206, %v59
    %v208 = vpop.permute.xlu0 %207
    %211 = vset.pattern.permute.xlu0 0
    %212 = vperm.xlu0 %211, %v60
    %v213 = vpop.permute.xlu0 %212
    %216 = vset.pattern.permute.xlu0 0
    %217 = vperm.xlu0 %216, %v61
    %v218 = vpop.permute.xlu0 %217
    %221 = vset.pattern.permute.xlu0 0
    %222 = vperm.xlu0 %221, %v62
    %v223 = vpop.permute.xlu0 %222
    %226 = vset.pattern.permute.xlu0 0
    %227 = vperm.xlu0 %226, %v63
    %v228 = vpop.permute.xlu0 %227
    %231 = vset.pattern.permute.xlu0 0
    %232 = vperm.xlu0 %231, %v64
    %v233 = vpop.permute.xlu0 %232
    %236 = vset.pattern.permute.xlu0 0
    %237 = vperm.xlu0 %236, %v65
    %v238 = vpop.permute.xlu0 %237
    %241 = vset.pattern.permute.xlu0 0
    %242 = vperm.xlu0 %241, %v66
    %v243 = vpop.permute.xlu0 %242
    %246 = vset.pattern.permute.xlu0 0
    %247 = vperm.xlu0 %246, %v67
    %v248 = vpop.permute.xlu0 %247
    %251 = vset.pattern.permute.xlu0 0
    %252 = vperm.xlu0 %251, %v68
    %v253 = vpop.permute.xlu0 %252
    %256 = vset.pattern.permute.xlu0 0
    %257 = vperm.xlu0 %256, %v69
    %v258 = vpop.permute.xlu0 %257
    %261 = vset.pattern.permute.xlu0 0
    %262 = vperm.xlu0 %261, %v70
    %v263 = vpop.permute.xlu0 %262
    %266 = vset.pattern.permute.xlu0 0
    %267 = vperm.xlu0 %266, %v71
    %v268 = vpop.permute.xlu0 %267
    %v270 = vmul.f32 %v97, %v113
    %v271 = vmul.f32 %v101, %v113
    %v272 = vmul.f32 %v97, %v118
    %v273 = vmul.f32 %v101, %v118
    %v274 = vmul.f32 %v97, %v123
    %v275 = vmul.f32 %v101, %v123
    %v276 = vmul.f32 %v97, %v128
    %v277 = vmul.f32 %v101, %v128
    %v278 = vmul.f32 %v97, %v133
    %v279 = vmul.f32 %v101, %v133
    %v280 = vmul.f32 %v97, %v138
    %v281 = vmul.f32 %v101, %v138
    %v282 = vmul.f32 %v97, %v143
    %v283 = vmul.f32 %v101, %v143
    %v284 = vmul.f32 %v97, %v148
    %v285 = vmul.f32 %v101, %v148
    %v286 = vmul.f32 %v97, %v153
    %v287 = vmul.f32 %v101, %v153
    %v288 = vmul.f32 %v97, %v158
    %v289 = vmul.f32 %v101, %v158
    %v290 = vmul.f32 %v97, %v163
    %v291 = vmul.f32 %v101, %v163
    %v292 = vmul.f32 %v97, %v168
    %v293 = vmul.f32 %v101, %v168
    %v294 = vmul.f32 %v97, %v173
    %v295 = vmul.f32 %v101, %v173
    %v296 = vmul.f32 %v97, %v178
    %v297 = vmul.f32 %v101, %v178
    %v298 = vmul.f32 %v97, %v183
    %v299 = vmul.f32 %v101, %v183
    %v300 = vmul.f32 %v97, %v188
    %v301 = vmul.f32 %v101, %v188
    %v302 = vmul.f32 %v97, %v193
    %v303 = vmul.f32 %v101, %v193
    %v304 = vmul.f32 %v97, %v198
    %v305 = vmul.f32 %v101, %v198
    %v306 = vmul.f32 %v97, %v203
    %v307 = vmul.f32 %v101, %v203
    %v308 = vmul.f32 %v97, %v208
    %v309 = vmul.f32 %v101, %v208
    %v310 = vmul.f32 %v97, %v213
    %v311 = vmul.f32 %v101, %v213
    %v312 = vmul.f32 %v97, %v218
    %v313 = vmul.f32 %v101, %v218
    %v314 = vmul.f32 %v97, %v223
    %v315 = vmul.f32 %v101, %v223
    %v316 = vmul.f32 %v97, %v228
    %v317 = vmul.f32 %v101, %v228
    %v318 = vmul.f32 %v97, %v233
    %v319 = vmul.f32 %v101, %v233
    %v320 = vmul.f32 %v97, %v238
    %v321 = vmul.f32 %v101, %v238
    %v322 = vmul.f32 %v97, %v243
    %v323 = vmul.f32 %v101, %v243
    %v324 = vmul.f32 %v97, %v248
    %v325 = vmul.f32 %v101, %v248
    %v326 = vmul.f32 %v97, %v253
    %v327 = vmul.f32 %v101, %v253
    %v328 = vmul.f32 %v97, %v258
    %v329 = vmul.f32 %v101, %v258
    %v330 = vmul.f32 %v97, %v263
    %v331 = vmul.f32 %v101, %v263
    %v332 = vmul.f32 %v97, %v268
    %v333 = vmul.f32 %v101, %v268
    %v334 = vmul.f32 %v105, %v113
    %v335 = vmul.f32 %v109, %v113
    %v336 = vmul.f32 %v105, %v118
    %v337 = vmul.f32 %v109, %v118
    %v338 = vmul.f32 %v105, %v123
    %v339 = vmul.f32 %v109, %v123
    %v340 = vmul.f32 %v105, %v128
    %v341 = vmul.f32 %v109, %v128
    %v342 = vmul.f32 %v105, %v133
    %v343 = vmul.f32 %v109, %v133
    %v344 = vmul.f32 %v105, %v138
    %v345 = vmul.f32 %v109, %v138
    %v346 = vmul.f32 %v105, %v143
    %v347 = vmul.f32 %v109, %v143
    %v348 = vmul.f32 %v105, %v148
    %v349 = vmul.f32 %v109, %v148
    %v350 = vmul.f32 %v105, %v153
    %v351 = vmul.f32 %v109, %v153
    %v352 = vmul.f32 %v105, %v158
    %v353 = vmul.f32 %v109, %v158
    %v354 = vmul.f32 %v105, %v163
    %v355 = vmul.f32 %v109, %v163
    %v356 = vmul.f32 %v105, %v168
    %v357 = vmul.f32 %v109, %v168
    %v358 = vmul.f32 %v105, %v173
    %v359 = vmul.f32 %v109, %v173
    %v360 = vmul.f32 %v105, %v178
    %v361 = vmul.f32 %v109, %v178
    %v362 = vmul.f32 %v105, %v183
    %v363 = vmul.f32 %v109, %v183
    %v364 = vmul.f32 %v105, %v188
    %v365 = vmul.f32 %v109, %v188
    %v366 = vmul.f32 %v105, %v193
    %v367 = vmul.f32 %v109, %v193
    %v368 = vmul.f32 %v105, %v198
    %v369 = vmul.f32 %v109, %v198
    %v370 = vmul.f32 %v105, %v203
    %v371 = vmul.f32 %v109, %v203
    %v372 = vmul.f32 %v105, %v208
    %v373 = vmul.f32 %v109, %v208
    %v374 = vmul.f32 %v105, %v213
    %v375 = vmul.f32 %v109, %v213
    %v376 = vmul.f32 %v105, %v218
    %v377 = vmul.f32 %v109, %v218
    %v378 = vmul.f32 %v105, %v223
    %v379 = vmul.f32 %v109, %v223
    %v380 = vmul.f32 %v105, %v228
    %v381 = vmul.f32 %v109, %v228
    %v382 = vmul.f32 %v105, %v233
    %v383 = vmul.f32 %v109, %v233
    %v384 = vmul.f32 %v105, %v238
    %v385 = vmul.f32 %v109, %v238
    %v386 = vmul.f32 %v105, %v243
    %v387 = vmul.f32 %v109, %v243
    %v388 = vmul.f32 %v105, %v248
    %v389 = vmul.f32 %v109, %v248
    %v390 = vmul.f32 %v105, %v253
    %v391 = vmul.f32 %v109, %v253
    %v392 = vmul.f32 %v105, %v258
    %v393 = vmul.f32 %v109, %v258
    %v394 = vmul.f32 %v105, %v263
    %v395 = vmul.f32 %v109, %v263
    %v396 = vmul.f32 %v105, %v268
    %v397 = vmul.f32 %v109, %v268
    %v398 = vlaneseq
    %v399 = vshrl.u32 %v398, 7
    %v400 = vsub.s32 1, %v399
    %v401 = vrot.slane %v38, %v400
    %v402 = vlaneseq
    %v403 = vshrl.u32 %v402, 7
    %v404 = vsub.s32 5, %v403
    %v405 = vrot.slane %v38, %v404
    %v406 = vlaneseq
    %v407 = vshrl.u32 %v406, 7
    %v408 = vsub.s32 1, %v407
    %v409 = vrot.slane %v39, %v408
    %v410 = vlaneseq
    %v411 = vshrl.u32 %v410, 7
    %v412 = vsub.s32 5, %v411
    %v413 = vrot.slane %v39, %v412
    %v418 = vlaneseq
    %v419 = vshrl.u32 %v418, 7
    %v420 = vsub.s32 1, %v419
    %v421 = vrot.slane %v401, %v420
    %v422 = vlaneseq
    %v423 = vshrl.u32 %v422, 7
    %v424 = vsub.s32 1, %v423
    %v425 = vrot.slane %v405, %v424
    %v426 = vlaneseq
    %v427 = vshrl.u32 %v426, 7
    %v428 = vsub.s32 1, %v427
    %v429 = vrot.slane %v409, %v428
    %v430 = vlaneseq
    %v431 = vshrl.u32 %v430, 7
    %v432 = vsub.s32 1, %v431
    %v433 = vrot.slane %v413, %v432
    %434 = vset.pattern.permute.xlu0 1
    %435 = vperm.xlu0 %434, %v40
    %v436 = vpop.permute.xlu0 %435
    %438 = vset.pattern.permute.xlu0 1
    %439 = vperm.xlu0 %438, %v41
    %v440 = vpop.permute.xlu0 %439
    %442 = vset.pattern.permute.xlu0 1
    %443 = vperm.xlu0 %442, %v42
    %v444 = vpop.permute.xlu0 %443
    %446 = vset.pattern.permute.xlu0 1
    %447 = vperm.xlu0 %446, %v43
    %v448 = vpop.permute.xlu0 %447
    %450 = vset.pattern.permute.xlu0 1
    %451 = vperm.xlu0 %450, %v44
    %v452 = vpop.permute.xlu0 %451
    %454 = vset.pattern.permute.xlu0 1
    %455 = vperm.xlu0 %454, %v45
    %v456 = vpop.permute.xlu0 %455
    %458 = vset.pattern.permute.xlu0 1
    %459 = vperm.xlu0 %458, %v46
    %v460 = vpop.permute.xlu0 %459
    %462 = vset.pattern.permute.xlu0 1
    %463 = vperm.xlu0 %462, %v47
    %v464 = vpop.permute.xlu0 %463
    %466 = vset.pattern.permute.xlu0 1
    %467 = vperm.xlu0 %466, %v48
    %v468 = vpop.permute.xlu0 %467
    %470 = vset.pattern.permute.xlu0 1
    %471 = vperm.xlu0 %470, %v49
    %v472 = vpop.permute.xlu0 %471
    %474 = vset.pattern.permute.xlu0 1
    %475 = vperm.xlu0 %474, %v50
    %v476 = vpop.permute.xlu0 %475
    %478 = vset.pattern.permute.xlu0 1
    %479 = vperm.xlu0 %478, %v51
    %v480 = vpop.permute.xlu0 %479
    %482 = vset.pattern.permute.xlu0 1
    %483 = vperm.xlu0 %482, %v52
    %v484 = vpop.permute.xlu0 %483
    %486 = vset.pattern.permute.xlu0 1
    %487 = vperm.xlu0 %486, %v53
    %v488 = vpop.permute.xlu0 %487
    %490 = vset.pattern.permute.xlu0 1
    %491 = vperm.xlu0 %490, %v54
    %v492 = vpop.permute.xlu0 %491
    %494 = vset.pattern.permute.xlu0 1
    %495 = vperm.xlu0 %494, %v55
    %v496 = vpop.permute.xlu0 %495
    %498 = vset.pattern.permute.xlu0 1
    %499 = vperm.xlu0 %498, %v56
    %v500 = vpop.permute.xlu0 %499
    %502 = vset.pattern.permute.xlu0 1
    %503 = vperm.xlu0 %502, %v57
    %v504 = vpop.permute.xlu0 %503
    %506 = vset.pattern.permute.xlu0 1
    %507 = vperm.xlu0 %506, %v58
    %v508 = vpop.permute.xlu0 %507
    %510 = vset.pattern.permute.xlu0 1
    %511 = vperm.xlu0 %510, %v59
    %v512 = vpop.permute.xlu0 %511
    %514 = vset.pattern.permute.xlu0 1
    %515 = vperm.xlu0 %514, %v60
    %v516 = vpop.permute.xlu0 %515
    %518 = vset.pattern.permute.xlu0 1
    %519 = vperm.xlu0 %518, %v61
    %v520 = vpop.permute.xlu0 %519
    %522 = vset.pattern.permute.xlu0 1
    %523 = vperm.xlu0 %522, %v62
    %v524 = vpop.permute.xlu0 %523
    %526 = vset.pattern.permute.xlu0 1
    %527 = vperm.xlu0 %526, %v63
    %v528 = vpop.permute.xlu0 %527
    %530 = vset.pattern.permute.xlu0 1
    %531 = vperm.xlu0 %530, %v64
    %v532 = vpop.permute.xlu0 %531
    %534 = vset.pattern.permute.xlu0 1
    %535 = vperm.xlu0 %534, %v65
    %v536 = vpop.permute.xlu0 %535
    %538 = vset.pattern.permute.xlu0 1
    %539 = vperm.xlu0 %538, %v66
    %v540 = vpop.permute.xlu0 %539
    %542 = vset.pattern.permute.xlu0 1
    %543 = vperm.xlu0 %542, %v67
    %v544 = vpop.permute.xlu0 %543
    %546 = vset.pattern.permute.xlu0 1
    %547 = vperm.xlu0 %546, %v68
    %v548 = vpop.permute.xlu0 %547
    %550 = vset.pattern.permute.xlu0 1
    %551 = vperm.xlu0 %550, %v69
    %v552 = vpop.permute.xlu0 %551
    %554 = vset.pattern.permute.xlu0 1
    %555 = vperm.xlu0 %554, %v70
    %v556 = vpop.permute.xlu0 %555
    %558 = vset.pattern.permute.xlu0 1
    %559 = vperm.xlu0 %558, %v71
    %v560 = vpop.permute.xlu0 %559
    %v562 = vmul.f32 %v421, %v436
    %v563 = vmul.f32 %v425, %v436
    %v564 = vmul.f32 %v421, %v440
    %v565 = vmul.f32 %v425, %v440
    %v566 = vmul.f32 %v421, %v444
    %v567 = vmul.f32 %v425, %v444
    %v568 = vmul.f32 %v421, %v448
    %v569 = vmul.f32 %v425, %v448
    %v570 = vmul.f32 %v421, %v452
    %v571 = vmul.f32 %v425, %v452
    %v572 = vmul.f32 %v421, %v456
    %v573 = vmul.f32 %v425, %v456
    %v574 = vmul.f32 %v421, %v460
    %v575 = vmul.f32 %v425, %v460
    %v576 = vmul.f32 %v421, %v464
    %v577 = vmul.f32 %v425, %v464
    %v578 = vmul.f32 %v421, %v468
    %v579 = vmul.f32 %v425, %v468
    %v580 = vmul.f32 %v421, %v472
    %v581 = vmul.f32 %v425, %v472
    %v582 = vmul.f32 %v421, %v476
    %v583 = vmul.f32 %v425, %v476
    %v584 = vmul.f32 %v421, %v480
    %v585 = vmul.f32 %v425, %v480
    %v586 = vmul.f32 %v421, %v484
    %v587 = vmul.f32 %v425, %v484
    %v588 = vmul.f32 %v421, %v488
    %v589 = vmul.f32 %v425, %v488
    %v590 = vmul.f32 %v421, %v492
    %v591 = vmul.f32 %v425, %v492
    %v592 = vmul.f32 %v421, %v496
    %v593 = vmul.f32 %v425, %v496
    %v594 = vmul.f32 %v421, %v500
    %v595 = vmul.f32 %v425, %v500
    %v596 = vmul.f32 %v421, %v504
    %v597 = vmul.f32 %v425, %v504
    %v598 = vmul.f32 %v421, %v508
    %v599 = vmul.f32 %v425, %v508
    %v600 = vmul.f32 %v421, %v512
    %v601 = vmul.f32 %v425, %v512
    %v602 = vmul.f32 %v421, %v516
    %v603 = vmul.f32 %v425, %v516
    %v604 = vmul.f32 %v421, %v520
    %v605 = vmul.f32 %v425, %v520
    %v606 = vmul.f32 %v421, %v524
    %v607 = vmul.f32 %v425, %v524
    %v608 = vmul.f32 %v421, %v528
    %v609 = vmul.f32 %v425, %v528
    %v610 = vmul.f32 %v421, %v532
    %v611 = vmul.f32 %v425, %v532
    %v612 = vmul.f32 %v421, %v536
    %v613 = vmul.f32 %v425, %v536
    %v614 = vmul.f32 %v421, %v540
    %v615 = vmul.f32 %v425, %v540
    %v616 = vmul.f32 %v421, %v544
    %v617 = vmul.f32 %v425, %v544
    %v618 = vmul.f32 %v421, %v548
    %v619 = vmul.f32 %v425, %v548
    %v620 = vmul.f32 %v421, %v552
    %v621 = vmul.f32 %v425, %v552
    %v622 = vmul.f32 %v421, %v556
    %v623 = vmul.f32 %v425, %v556
    %v624 = vmul.f32 %v421, %v560
    %v625 = vmul.f32 %v425, %v560
    %v626 = vmul.f32 %v429, %v436
    %v627 = vmul.f32 %v433, %v436
    %v628 = vmul.f32 %v429, %v440
    %v629 = vmul.f32 %v433, %v440
    %v630 = vmul.f32 %v429, %v444
    %v631 = vmul.f32 %v433, %v444
    %v632 = vmul.f32 %v429, %v448
    %v633 = vmul.f32 %v433, %v448
    %v634 = vmul.f32 %v429, %v452
    %v635 = vmul.f32 %v433, %v452
    %v636 = vmul.f32 %v429, %v456
    %v637 = vmul.f32 %v433, %v456
    %v638 = vmul.f32 %v429, %v460
    %v639 = vmul.f32 %v433, %v460
    %v640 = vmul.f32 %v429, %v464
    %v641 = vmul.f32 %v433, %v464
    %v642 = vmul.f32 %v429, %v468
    %v643 = vmul.f32 %v433, %v468
    %v644 = vmul.f32 %v429, %v472
    %v645 = vmul.f32 %v433, %v472
    %v646 = vmul.f32 %v429, %v476
    %v647 = vmul.f32 %v433, %v476
    %v648 = vmul.f32 %v429, %v480
    %v649 = vmul.f32 %v433, %v480
    %v650 = vmul.f32 %v429, %v484
    %v651 = vmul.f32 %v433, %v484
    %v652 = vmul.f32 %v429, %v488
    %v653 = vmul.f32 %v433, %v488
    %v654 = vmul.f32 %v429, %v492
    %v655 = vmul.f32 %v433, %v492
    %v656 = vmul.f32 %v429, %v496
    %v657 = vmul.f32 %v433, %v496
    %v658 = vmul.f32 %v429, %v500
    %v659 = vmul.f32 %v433, %v500
    %v660 = vmul.f32 %v429, %v504
    %v661 = vmul.f32 %v433, %v504
    %v662 = vmul.f32 %v429, %v508
    %v663 = vmul.f32 %v433, %v508
    %v664 = vmul.f32 %v429, %v512
    %v665 = vmul.f32 %v433, %v512
    %v666 = vmul.f32 %v429, %v516
    %v667 = vmul.f32 %v433, %v516
    %v668 = vmul.f32 %v429, %v520
    %v669 = vmul.f32 %v433, %v520
    %v670 = vmul.f32 %v429, %v524
    %v671 = vmul.f32 %v433, %v524
    %v672 = vmul.f32 %v429, %v528
    %v673 = vmul.f32 %v433, %v528
    %v674 = vmul.f32 %v429, %v532
    %v675 = vmul.f32 %v433, %v532
    %v676 = vmul.f32 %v429, %v536
    %v677 = vmul.f32 %v433, %v536
    %v678 = vmul.f32 %v429, %v540
    %v679 = vmul.f32 %v433, %v540
    %v680 = vmul.f32 %v429, %v544
    %v681 = vmul.f32 %v433, %v544
    %v682 = vmul.f32 %v429, %v548
    %v683 = vmul.f32 %v433, %v548
    %v684 = vmul.f32 %v429, %v552
    %v685 = vmul.f32 %v433, %v552
    %v686 = vmul.f32 %v429, %v556
    %v687 = vmul.f32 %v433, %v556
    %v688 = vmul.f32 %v429, %v560
    %v689 = vmul.f32 %v433, %v560
    %v690 = vadd.f32 %v270, %v562
    %v691 = vadd.f32 %v271, %v563
    %v692 = vadd.f32 %v272, %v564
    %v693 = vadd.f32 %v273, %v565
    %v694 = vadd.f32 %v274, %v566
    %v695 = vadd.f32 %v275, %v567
    %v696 = vadd.f32 %v276, %v568
    %v697 = vadd.f32 %v277, %v569
    %v698 = vadd.f32 %v278, %v570
    %v699 = vadd.f32 %v279, %v571
    %v700 = vadd.f32 %v280, %v572
    %v701 = vadd.f32 %v281, %v573
    %v702 = vadd.f32 %v282, %v574
    %v703 = vadd.f32 %v283, %v575
    %v704 = vadd.f32 %v284, %v576
    %v705 = vadd.f32 %v285, %v577
    %v706 = vadd.f32 %v286, %v578
    %v707 = vadd.f32 %v287, %v579
    %v708 = vadd.f32 %v288, %v580
    %v709 = vadd.f32 %v289, %v581
    %v710 = vadd.f32 %v290, %v582
    %v711 = vadd.f32 %v291, %v583
    %v712 = vadd.f32 %v292, %v584
    %v713 = vadd.f32 %v293, %v585
    %v714 = vadd.f32 %v294, %v586
    %v715 = vadd.f32 %v295, %v587
    %v716 = vadd.f32 %v296, %v588
    %v717 = vadd.f32 %v297, %v589
    %v718 = vadd.f32 %v298, %v590
    %v719 = vadd.f32 %v299, %v591
    %v720 = vadd.f32 %v300, %v592
    %v721 = vadd.f32 %v301, %v593
    %v722 = vadd.f32 %v302, %v594
    %v723 = vadd.f32 %v303, %v595
    %v724 = vadd.f32 %v304, %v596
    %v725 = vadd.f32 %v305, %v597
    %v726 = vadd.f32 %v306, %v598
    %v727 = vadd.f32 %v307, %v599
    %v728 = vadd.f32 %v308, %v600
    %v729 = vadd.f32 %v309, %v601
    %v730 = vadd.f32 %v310, %v602
    %v731 = vadd.f32 %v311, %v603
    %v732 = vadd.f32 %v312, %v604
    %v733 = vadd.f32 %v313, %v605
    %v734 = vadd.f32 %v314, %v606
    %v735 = vadd.f32 %v315, %v607
    %v736 = vadd.f32 %v316, %v608
    %v737 = vadd.f32 %v317, %v609
    %v738 = vadd.f32 %v318, %v610
    %v739 = vadd.f32 %v319, %v611
    %v740 = vadd.f32 %v320, %v612
    %v741 = vadd.f32 %v321, %v613
    %v742 = vadd.f32 %v322, %v614
    %v743 = vadd.f32 %v323, %v615
    %v744 = vadd.f32 %v324, %v616
    %v745 = vadd.f32 %v325, %v617
    %v746 = vadd.f32 %v326, %v618
    %v747 = vadd.f32 %v327, %v619
    %v748 = vadd.f32 %v328, %v620
    %v749 = vadd.f32 %v329, %v621
    %v750 = vadd.f32 %v330, %v622
    %v751 = vadd.f32 %v331, %v623
    %v752 = vadd.f32 %v332, %v624
    %v753 = vadd.f32 %v333, %v625
    %v754 = vadd.f32 %v334, %v626
    %v755 = vadd.f32 %v335, %v627
    %v756 = vadd.f32 %v336, %v628
    %v757 = vadd.f32 %v337, %v629
    %v758 = vadd.f32 %v338, %v630
    %v759 = vadd.f32 %v339, %v631
    %v760 = vadd.f32 %v340, %v632
    %v761 = vadd.f32 %v341, %v633
    %v762 = vadd.f32 %v342, %v634
    %v763 = vadd.f32 %v343, %v635
    %v764 = vadd.f32 %v344, %v636
    %v765 = vadd.f32 %v345, %v637
    %v766 = vadd.f32 %v346, %v638
    %v767 = vadd.f32 %v347, %v639
    %v768 = vadd.f32 %v348, %v640
    %v769 = vadd.f32 %v349, %v641
    %v770 = vadd.f32 %v350, %v642
    %v771 = vadd.f32 %v351, %v643
    %v772 = vadd.f32 %v352, %v644
    %v773 = vadd.f32 %v353, %v645
    %v774 = vadd.f32 %v354, %v646
    %v775 = vadd.f32 %v355, %v647
    %v776 = vadd.f32 %v356, %v648
    %v777 = vadd.f32 %v357, %v649
    %v778 = vadd.f32 %v358, %v650
    %v779 = vadd.f32 %v359, %v651
    %v780 = vadd.f32 %v360, %v652
    %v781 = vadd.f32 %v361, %v653
    %v782 = vadd.f32 %v362, %v654
    %v783 = vadd.f32 %v363, %v655
    %v784 = vadd.f32 %v364, %v656
    %v785 = vadd.f32 %v365, %v657
    %v786 = vadd.f32 %v366, %v658
    %v787 = vadd.f32 %v367, %v659
    %v788 = vadd.f32 %v368, %v660
    %v789 = vadd.f32 %v369, %v661
    %v790 = vadd.f32 %v370, %v662
    %v791 = vadd.f32 %v371, %v663
    %v792 = vadd.f32 %v372, %v664
    %v793 = vadd.f32 %v373, %v665
    %v794 = vadd.f32 %v374, %v666
    %v795 = vadd.f32 %v375, %v667
    %v796 = vadd.f32 %v376, %v668
    %v797 = vadd.f32 %v377, %v669
    %v798 = vadd.f32 %v378, %v670
    %v799 = vadd.f32 %v379, %v671
    %v800 = vadd.f32 %v380, %v672
    %v801 = vadd.f32 %v381, %v673
    %v802 = vadd.f32 %v382, %v674
    %v803 = vadd.f32 %v383, %v675
    %v804 = vadd.f32 %v384, %v676
    %v805 = vadd.f32 %v385, %v677
    %v806 = vadd.f32 %v386, %v678
    %v807 = vadd.f32 %v387, %v679
    %v808 = vadd.f32 %v388, %v680
    %v809 = vadd.f32 %v389, %v681
    %v810 = vadd.f32 %v390, %v682
    %v811 = vadd.f32 %v391, %v683
    %v812 = vadd.f32 %v392, %v684
    %v813 = vadd.f32 %v393, %v685
    %v814 = vadd.f32 %v394, %v686
    %v815 = vadd.f32 %v395, %v687
    %v816 = vadd.f32 %v396, %v688
    %v817 = vadd.f32 %v397, %v689
    %v818 = vlaneseq
    %v819 = vshrl.u32 %v818, 7
    %v820 = vsub.s32 2, %v819
    %v821 = vrot.slane %v38, %v820
    %v822 = vlaneseq
    %v823 = vshrl.u32 %v822, 7
    %v824 = vsub.s32 6, %v823
    %v825 = vrot.slane %v38, %v824
    %v826 = vlaneseq
    %v827 = vshrl.u32 %v826, 7
    %v828 = vsub.s32 2, %v827
    %v829 = vrot.slane %v39, %v828
    %v830 = vlaneseq
    %v831 = vshrl.u32 %v830, 7
    %v832 = vsub.s32 6, %v831
    %v833 = vrot.slane %v39, %v832
    %v838 = vlaneseq
    %v839 = vshrl.u32 %v838, 7
    %v840 = vsub.s32 2, %v839
    %v841 = vrot.slane %v821, %v840
    %v842 = vlaneseq
    %v843 = vshrl.u32 %v842, 7
    %v844 = vsub.s32 2, %v843
    %v845 = vrot.slane %v825, %v844
    %v846 = vlaneseq
    %v847 = vshrl.u32 %v846, 7
    %v848 = vsub.s32 2, %v847
    %v849 = vrot.slane %v829, %v848
    %v850 = vlaneseq
    %v851 = vshrl.u32 %v850, 7
    %v852 = vsub.s32 2, %v851
    %v853 = vrot.slane %v833, %v852
    %854 = vset.pattern.permute.xlu0 2
    %855 = vperm.xlu0 %854, %v40
    %v856 = vpop.permute.xlu0 %855
    %858 = vset.pattern.permute.xlu0 2
    %859 = vperm.xlu0 %858, %v41
    %v860 = vpop.permute.xlu0 %859
    %862 = vset.pattern.permute.xlu0 2
    %863 = vperm.xlu0 %862, %v42
    %v864 = vpop.permute.xlu0 %863
    %866 = vset.pattern.permute.xlu0 2
    %867 = vperm.xlu0 %866, %v43
    %v868 = vpop.permute.xlu0 %867
    %870 = vset.pattern.permute.xlu0 2
    %871 = vperm.xlu0 %870, %v44
    %v872 = vpop.permute.xlu0 %871
    %874 = vset.pattern.permute.xlu0 2
    %875 = vperm.xlu0 %874, %v45
    %v876 = vpop.permute.xlu0 %875
    %878 = vset.pattern.permute.xlu0 2
    %879 = vperm.xlu0 %878, %v46
    %v880 = vpop.permute.xlu0 %879
    %882 = vset.pattern.permute.xlu0 2
    %883 = vperm.xlu0 %882, %v47
    %v884 = vpop.permute.xlu0 %883
    %886 = vset.pattern.permute.xlu0 2
    %887 = vperm.xlu0 %886, %v48
    %v888 = vpop.permute.xlu0 %887
    %890 = vset.pattern.permute.xlu0 2
    %891 = vperm.xlu0 %890, %v49
    %v892 = vpop.permute.xlu0 %891
    %894 = vset.pattern.permute.xlu0 2
    %895 = vperm.xlu0 %894, %v50
    %v896 = vpop.permute.xlu0 %895
    %898 = vset.pattern.permute.xlu0 2
    %899 = vperm.xlu0 %898, %v51
    %v900 = vpop.permute.xlu0 %899
    %902 = vset.pattern.permute.xlu0 2
    %903 = vperm.xlu0 %902, %v52
    %v904 = vpop.permute.xlu0 %903
    %906 = vset.pattern.permute.xlu0 2
    %907 = vperm.xlu0 %906, %v53
    %v908 = vpop.permute.xlu0 %907
    %910 = vset.pattern.permute.xlu0 2
    %911 = vperm.xlu0 %910, %v54
    %v912 = vpop.permute.xlu0 %911
    %914 = vset.pattern.permute.xlu0 2
    %915 = vperm.xlu0 %914, %v55
    %v916 = vpop.permute.xlu0 %915
    %918 = vset.pattern.permute.xlu0 2
    %919 = vperm.xlu0 %918, %v56
    %v920 = vpop.permute.xlu0 %919
    %922 = vset.pattern.permute.xlu0 2
    %923 = vperm.xlu0 %922, %v57
    %v924 = vpop.permute.xlu0 %923
    %926 = vset.pattern.permute.xlu0 2
    %927 = vperm.xlu0 %926, %v58
    %v928 = vpop.permute.xlu0 %927
    %930 = vset.pattern.permute.xlu0 2
    %931 = vperm.xlu0 %930, %v59
    %v932 = vpop.permute.xlu0 %931
    %934 = vset.pattern.permute.xlu0 2
    %935 = vperm.xlu0 %934, %v60
    %v936 = vpop.permute.xlu0 %935
    %938 = vset.pattern.permute.xlu0 2
    %939 = vperm.xlu0 %938, %v61
    %v940 = vpop.permute.xlu0 %939
    %942 = vset.pattern.permute.xlu0 2
    %943 = vperm.xlu0 %942, %v62
    %v944 = vpop.permute.xlu0 %943
    %946 = vset.pattern.permute.xlu0 2
    %947 = vperm.xlu0 %946, %v63
    %v948 = vpop.permute.xlu0 %947
    %950 = vset.pattern.permute.xlu0 2
    %951 = vperm.xlu0 %950, %v64
    %v952 = vpop.permute.xlu0 %951
    %954 = vset.pattern.permute.xlu0 2
    %955 = vperm.xlu0 %954, %v65
    %v956 = vpop.permute.xlu0 %955
    %958 = vset.pattern.permute.xlu0 2
    %959 = vperm.xlu0 %958, %v66
    %v960 = vpop.permute.xlu0 %959
    %962 = vset.pattern.permute.xlu0 2
    %963 = vperm.xlu0 %962, %v67
    %v964 = vpop.permute.xlu0 %963
    %966 = vset.pattern.permute.xlu0 2
    %967 = vperm.xlu0 %966, %v68
    %v968 = vpop.permute.xlu0 %967
    %970 = vset.pattern.permute.xlu0 2
    %971 = vperm.xlu0 %970, %v69
    %v972 = vpop.permute.xlu0 %971
    %974 = vset.pattern.permute.xlu0 2
    %975 = vperm.xlu0 %974, %v70
    %v976 = vpop.permute.xlu0 %975
    %978 = vset.pattern.permute.xlu0 2
    %979 = vperm.xlu0 %978, %v71
    %v980 = vpop.permute.xlu0 %979
    %v982 = vmul.f32 %v841, %v856
    %v983 = vmul.f32 %v845, %v856
    %v984 = vmul.f32 %v841, %v860
    %v985 = vmul.f32 %v845, %v860
    %v986 = vmul.f32 %v841, %v864
    %v987 = vmul.f32 %v845, %v864
    %v988 = vmul.f32 %v841, %v868
    %v989 = vmul.f32 %v845, %v868
    %v990 = vmul.f32 %v841, %v872
    %v991 = vmul.f32 %v845, %v872
    %v992 = vmul.f32 %v841, %v876
    %v993 = vmul.f32 %v845, %v876
    %v994 = vmul.f32 %v841, %v880
    %v995 = vmul.f32 %v845, %v880
    %v996 = vmul.f32 %v841, %v884
    %v997 = vmul.f32 %v845, %v884
    %v998 = vmul.f32 %v841, %v888
    %v999 = vmul.f32 %v845, %v888
    %v1000 = vmul.f32 %v841, %v892
    %v1001 = vmul.f32 %v845, %v892
    %v1002 = vmul.f32 %v841, %v896
    %v1003 = vmul.f32 %v845, %v896
    %v1004 = vmul.f32 %v841, %v900
    %v1005 = vmul.f32 %v845, %v900
    %v1006 = vmul.f32 %v841, %v904
    %v1007 = vmul.f32 %v845, %v904
    %v1008 = vmul.f32 %v841, %v908
    %v1009 = vmul.f32 %v845, %v908
    %v1010 = vmul.f32 %v841, %v912
    %v1011 = vmul.f32 %v845, %v912
    %v1012 = vmul.f32 %v841, %v916
    %v1013 = vmul.f32 %v845, %v916
    %v1014 = vmul.f32 %v841, %v920
    %v1015 = vmul.f32 %v845, %v920
    %v1016 = vmul.f32 %v841, %v924
    %v1017 = vmul.f32 %v845, %v924
    %v1018 = vmul.f32 %v841, %v928
    %v1019 = vmul.f32 %v845, %v928
    %v1020 = vmul.f32 %v841, %v932
    %v1021 = vmul.f32 %v845, %v932
    %v1022 = vmul.f32 %v841, %v936
    %v1023 = vmul.f32 %v845, %v936
    %v1024 = vmul.f32 %v841, %v940
    %v1025 = vmul.f32 %v845, %v940
    %v1026 = vmul.f32 %v841, %v944
    %v1027 = vmul.f32 %v845, %v944
    %v1028 = vmul.f32 %v841, %v948
    %v1029 = vmul.f32 %v845, %v948
    %v1030 = vmul.f32 %v841, %v952
    %v1031 = vmul.f32 %v845, %v952
    %v1032 = vmul.f32 %v841, %v956
    %v1033 = vmul.f32 %v845, %v956
    %v1034 = vmul.f32 %v841, %v960
    %v1035 = vmul.f32 %v845, %v960
    %v1036 = vmul.f32 %v841, %v964
    %v1037 = vmul.f32 %v845, %v964
    %v1038 = vmul.f32 %v841, %v968
    %v1039 = vmul.f32 %v845, %v968
    %v1040 = vmul.f32 %v841, %v972
    %v1041 = vmul.f32 %v845, %v972
    %v1042 = vmul.f32 %v841, %v976
    %v1043 = vmul.f32 %v845, %v976
    %v1044 = vmul.f32 %v841, %v980
    %v1045 = vmul.f32 %v845, %v980
    %v1046 = vmul.f32 %v849, %v856
    %v1047 = vmul.f32 %v853, %v856
    %v1048 = vmul.f32 %v849, %v860
    %v1049 = vmul.f32 %v853, %v860
    %v1050 = vmul.f32 %v849, %v864
    %v1051 = vmul.f32 %v853, %v864
    %v1052 = vmul.f32 %v849, %v868
    %v1053 = vmul.f32 %v853, %v868
    %v1054 = vmul.f32 %v849, %v872
    %v1055 = vmul.f32 %v853, %v872
    %v1056 = vmul.f32 %v849, %v876
    %v1057 = vmul.f32 %v853, %v876
    %v1058 = vmul.f32 %v849, %v880
    %v1059 = vmul.f32 %v853, %v880
    %v1060 = vmul.f32 %v849, %v884
    %v1061 = vmul.f32 %v853, %v884
    %v1062 = vmul.f32 %v849, %v888
    %v1063 = vmul.f32 %v853, %v888
    %v1064 = vmul.f32 %v849, %v892
    %v1065 = vmul.f32 %v853, %v892
    %v1066 = vmul.f32 %v849, %v896
    %v1067 = vmul.f32 %v853, %v896
    %v1068 = vmul.f32 %v849, %v900
    %v1069 = vmul.f32 %v853, %v900
    %v1070 = vmul.f32 %v849, %v904
    %v1071 = vmul.f32 %v853, %v904
    %v1072 = vmul.f32 %v849, %v908
    %v1073 = vmul.f32 %v853, %v908
    %v1074 = vmul.f32 %v849, %v912
    %v1075 = vmul.f32 %v853, %v912
    %v1076 = vmul.f32 %v849, %v916
    %v1077 = vmul.f32 %v853, %v916
    %v1078 = vmul.f32 %v849, %v920
    %v1079 = vmul.f32 %v853, %v920
    %v1080 = vmul.f32 %v849, %v924
    %v1081 = vmul.f32 %v853, %v924
    %v1082 = vmul.f32 %v849, %v928
    %v1083 = vmul.f32 %v853, %v928
    %v1084 = vmul.f32 %v849, %v932
    %v1085 = vmul.f32 %v853, %v932
    %v1086 = vmul.f32 %v849, %v936
    %v1087 = vmul.f32 %v853, %v936
    %v1088 = vmul.f32 %v849, %v940
    %v1089 = vmul.f32 %v853, %v940
    %v1090 = vmul.f32 %v849, %v944
    %v1091 = vmul.f32 %v853, %v944
    %v1092 = vmul.f32 %v849, %v948
    %v1093 = vmul.f32 %v853, %v948
    %v1094 = vmul.f32 %v849, %v952
    %v1095 = vmul.f32 %v853, %v952
    %v1096 = vmul.f32 %v849, %v956
    %v1097 = vmul.f32 %v853, %v956
    %v1098 = vmul.f32 %v849, %v960
    %v1099 = vmul.f32 %v853, %v960
    %v1100 = vmul.f32 %v849, %v964
    %v1101 = vmul.f32 %v853, %v964
    %v1102 = vmul.f32 %v849, %v968
    %v1103 = vmul.f32 %v853, %v968
    %v1104 = vmul.f32 %v849, %v972
    %v1105 = vmul.f32 %v853, %v972
    %v1106 = vmul.f32 %v849, %v976
    %v1107 = vmul.f32 %v853, %v976
    %v1108 = vmul.f32 %v849, %v980
    %v1109 = vmul.f32 %v853, %v980
    %v1110 = vadd.f32 %v690, %v982
    %v1111 = vadd.f32 %v691, %v983
    %v1112 = vadd.f32 %v692, %v984
    %v1113 = vadd.f32 %v693, %v985
    %v1114 = vadd.f32 %v694, %v986
    %v1115 = vadd.f32 %v695, %v987
    %v1116 = vadd.f32 %v696, %v988
    %v1117 = vadd.f32 %v697, %v989
    %v1118 = vadd.f32 %v698, %v990
    %v1119 = vadd.f32 %v699, %v991
    %v1120 = vadd.f32 %v700, %v992
    %v1121 = vadd.f32 %v701, %v993
    %v1122 = vadd.f32 %v702, %v994
    %v1123 = vadd.f32 %v703, %v995
    %v1124 = vadd.f32 %v704, %v996
    %v1125 = vadd.f32 %v705, %v997
    %v1126 = vadd.f32 %v706, %v998
    %v1127 = vadd.f32 %v707, %v999
    %v1128 = vadd.f32 %v708, %v1000
    %v1129 = vadd.f32 %v709, %v1001
    %v1130 = vadd.f32 %v710, %v1002
    %v1131 = vadd.f32 %v711, %v1003
    %v1132 = vadd.f32 %v712, %v1004
    %v1133 = vadd.f32 %v713, %v1005
    %v1134 = vadd.f32 %v714, %v1006
    %v1135 = vadd.f32 %v715, %v1007
    %v1136 = vadd.f32 %v716, %v1008
    %v1137 = vadd.f32 %v717, %v1009
    %v1138 = vadd.f32 %v718, %v1010
    %v1139 = vadd.f32 %v719, %v1011
    %v1140 = vadd.f32 %v720, %v1012
    %v1141 = vadd.f32 %v721, %v1013
    %v1142 = vadd.f32 %v722, %v1014
    %v1143 = vadd.f32 %v723, %v1015
    %v1144 = vadd.f32 %v724, %v1016
    %v1145 = vadd.f32 %v725, %v1017
    %v1146 = vadd.f32 %v726, %v1018
    %v1147 = vadd.f32 %v727, %v1019
    %v1148 = vadd.f32 %v728, %v1020
    %v1149 = vadd.f32 %v729, %v1021
    %v1150 = vadd.f32 %v730, %v1022
    %v1151 = vadd.f32 %v731, %v1023
    %v1152 = vadd.f32 %v732, %v1024
    %v1153 = vadd.f32 %v733, %v1025
    %v1154 = vadd.f32 %v734, %v1026
    %v1155 = vadd.f32 %v735, %v1027
    %v1156 = vadd.f32 %v736, %v1028
    %v1157 = vadd.f32 %v737, %v1029
    %v1158 = vadd.f32 %v738, %v1030
    %v1159 = vadd.f32 %v739, %v1031
    %v1160 = vadd.f32 %v740, %v1032
    %v1161 = vadd.f32 %v741, %v1033
    %v1162 = vadd.f32 %v742, %v1034
    %v1163 = vadd.f32 %v743, %v1035
    %v1164 = vadd.f32 %v744, %v1036
    %v1165 = vadd.f32 %v745, %v1037
    %v1166 = vadd.f32 %v746, %v1038
    %v1167 = vadd.f32 %v747, %v1039
    %v1168 = vadd.f32 %v748, %v1040
    %v1169 = vadd.f32 %v749, %v1041
    %v1170 = vadd.f32 %v750, %v1042
    %v1171 = vadd.f32 %v751, %v1043
    %v1172 = vadd.f32 %v752, %v1044
    %v1173 = vadd.f32 %v753, %v1045
    %v1174 = vadd.f32 %v754, %v1046
    %v1175 = vadd.f32 %v755, %v1047
    %v1176 = vadd.f32 %v756, %v1048
    %v1177 = vadd.f32 %v757, %v1049
    %v1178 = vadd.f32 %v758, %v1050
    %v1179 = vadd.f32 %v759, %v1051
    %v1180 = vadd.f32 %v760, %v1052
    %v1181 = vadd.f32 %v761, %v1053
    %v1182 = vadd.f32 %v762, %v1054
    %v1183 = vadd.f32 %v763, %v1055
    %v1184 = vadd.f32 %v764, %v1056
    %v1185 = vadd.f32 %v765, %v1057
    %v1186 = vadd.f32 %v766, %v1058
    %v1187 = vadd.f32 %v767, %v1059
    %v1188 = vadd.f32 %v768, %v1060
    %v1189 = vadd.f32 %v769, %v1061
    %v1190 = vadd.f32 %v770, %v1062
    %v1191 = vadd.f32 %v771, %v1063
    %v1192 = vadd.f32 %v772, %v1064
    %v1193 = vadd.f32 %v773, %v1065
    %v1194 = vadd.f32 %v774, %v1066
    %v1195 = vadd.f32 %v775, %v1067
    %v1196 = vadd.f32 %v776, %v1068
    %v1197 = vadd.f32 %v777, %v1069
    %v1198 = vadd.f32 %v778, %v1070
    %v1199 = vadd.f32 %v779, %v1071
    %v1200 = vadd.f32 %v780, %v1072
    %v1201 = vadd.f32 %v781, %v1073
    %v1202 = vadd.f32 %v782, %v1074
    %v1203 = vadd.f32 %v783, %v1075
    %v1204 = vadd.f32 %v784, %v1076
    %v1205 = vadd.f32 %v785, %v1077
    %v1206 = vadd.f32 %v786, %v1078
    %v1207 = vadd.f32 %v787, %v1079
    %v1208 = vadd.f32 %v788, %v1080
    %v1209 = vadd.f32 %v789, %v1081
    %v1210 = vadd.f32 %v790, %v1082
    %v1211 = vadd.f32 %v791, %v1083
    %v1212 = vadd.f32 %v792, %v1084
    %v1213 = vadd.f32 %v793, %v1085
    %v1214 = vadd.f32 %v794, %v1086
    %v1215 = vadd.f32 %v795, %v1087
    %v1216 = vadd.f32 %v796, %v1088
    %v1217 = vadd.f32 %v797, %v1089
    %v1218 = vadd.f32 %v798, %v1090
    %v1219 = vadd.f32 %v799, %v1091
    %v1220 = vadd.f32 %v800, %v1092
    %v1221 = vadd.f32 %v801, %v1093
    %v1222 = vadd.f32 %v802, %v1094
    %v1223 = vadd.f32 %v803, %v1095
    %v1224 = vadd.f32 %v804, %v1096
    %v1225 = vadd.f32 %v805, %v1097
    %v1226 = vadd.f32 %v806, %v1098
    %v1227 = vadd.f32 %v807, %v1099
    %v1228 = vadd.f32 %v808, %v1100
    %v1229 = vadd.f32 %v809, %v1101
    %v1230 = vadd.f32 %v810, %v1102
    %v1231 = vadd.f32 %v811, %v1103
    %v1232 = vadd.f32 %v812, %v1104
    %v1233 = vadd.f32 %v813, %v1105
    %v1234 = vadd.f32 %v814, %v1106
    %v1235 = vadd.f32 %v815, %v1107
    %v1236 = vadd.f32 %v816, %v1108
    %v1237 = vadd.f32 %v817, %v1109
    %v1238 = vlaneseq
    %v1239 = vshrl.u32 %v1238, 7
    %v1240 = vsub.s32 3, %v1239
    %v1241 = vrot.slane %v38, %v1240
    %v1242 = vlaneseq
    %v1243 = vshrl.u32 %v1242, 7
    %v1244 = vsub.s32 7, %v1243
    %v1245 = vrot.slane %v38, %v1244
    %v1246 = vlaneseq
    %v1247 = vshrl.u32 %v1246, 7
    %v1248 = vsub.s32 3, %v1247
    %v1249 = vrot.slane %v39, %v1248
    %v1250 = vlaneseq
    %v1251 = vshrl.u32 %v1250, 7
    %v1252 = vsub.s32 7, %v1251
    %v1253 = vrot.slane %v39, %v1252
    %v1258 = vlaneseq
    %v1259 = vshrl.u32 %v1258, 7
    %v1260 = vsub.s32 3, %v1259
    %v1261 = vrot.slane %v1241, %v1260
    %v1262 = vlaneseq
    %v1263 = vshrl.u32 %v1262, 7
    %v1264 = vsub.s32 3, %v1263
    %v1265 = vrot.slane %v1245, %v1264
    %v1266 = vlaneseq
    %v1267 = vshrl.u32 %v1266, 7
    %v1268 = vsub.s32 3, %v1267
    %v1269 = vrot.slane %v1249, %v1268
    %v1270 = vlaneseq
    %v1271 = vshrl.u32 %v1270, 7
    %v1272 = vsub.s32 3, %v1271
    %v1273 = vrot.slane %v1253, %v1272
    %1274 = vset.pattern.permute.xlu0 3
    %1275 = vperm.xlu0 %1274, %v40
    %v1276 = vpop.permute.xlu0 %1275
    %1278 = vset.pattern.permute.xlu0 3
    %1279 = vperm.xlu0 %1278, %v41
    %v1280 = vpop.permute.xlu0 %1279
    %1282 = vset.pattern.permute.xlu0 3
    %1283 = vperm.xlu0 %1282, %v42
    %v1284 = vpop.permute.xlu0 %1283
    %1286 = vset.pattern.permute.xlu0 3
    %1287 = vperm.xlu0 %1286, %v43
    %v1288 = vpop.permute.xlu0 %1287
    %1290 = vset.pattern.permute.xlu0 3
    %1291 = vperm.xlu0 %1290, %v44
    %v1292 = vpop.permute.xlu0 %1291
    %1294 = vset.pattern.permute.xlu0 3
    %1295 = vperm.xlu0 %1294, %v45
    %v1296 = vpop.permute.xlu0 %1295
    %1298 = vset.pattern.permute.xlu0 3
    %1299 = vperm.xlu0 %1298, %v46
    %v1300 = vpop.permute.xlu0 %1299
    %1302 = vset.pattern.permute.xlu0 3
    %1303 = vperm.xlu0 %1302, %v47
    %v1304 = vpop.permute.xlu0 %1303
    %1306 = vset.pattern.permute.xlu0 3
    %1307 = vperm.xlu0 %1306, %v48
    %v1308 = vpop.permute.xlu0 %1307
    %1310 = vset.pattern.permute.xlu0 3
    %1311 = vperm.xlu0 %1310, %v49
    %v1312 = vpop.permute.xlu0 %1311
    %1314 = vset.pattern.permute.xlu0 3
    %1315 = vperm.xlu0 %1314, %v50
    %v1316 = vpop.permute.xlu0 %1315
    %1318 = vset.pattern.permute.xlu0 3
    %1319 = vperm.xlu0 %1318, %v51
    %v1320 = vpop.permute.xlu0 %1319
    %1322 = vset.pattern.permute.xlu0 3
    %1323 = vperm.xlu0 %1322, %v52
    %v1324 = vpop.permute.xlu0 %1323
    %1326 = vset.pattern.permute.xlu0 3
    %1327 = vperm.xlu0 %1326, %v53
    %v1328 = vpop.permute.xlu0 %1327
    %1330 = vset.pattern.permute.xlu0 3
    %1331 = vperm.xlu0 %1330, %v54
    %v1332 = vpop.permute.xlu0 %1331
    %1334 = vset.pattern.permute.xlu0 3
    %1335 = vperm.xlu0 %1334, %v55
    %v1336 = vpop.permute.xlu0 %1335
    %1338 = vset.pattern.permute.xlu0 3
    %1339 = vperm.xlu0 %1338, %v56
    %v1340 = vpop.permute.xlu0 %1339
    %1342 = vset.pattern.permute.xlu0 3
    %1343 = vperm.xlu0 %1342, %v57
    %v1344 = vpop.permute.xlu0 %1343
    %1346 = vset.pattern.permute.xlu0 3
    %1347 = vperm.xlu0 %1346, %v58
    %v1348 = vpop.permute.xlu0 %1347
    %1350 = vset.pattern.permute.xlu0 3
    %1351 = vperm.xlu0 %1350, %v59
    %v1352 = vpop.permute.xlu0 %1351
    %1354 = vset.pattern.permute.xlu0 3
    %1355 = vperm.xlu0 %1354, %v60
    %v1356 = vpop.permute.xlu0 %1355
    %1358 = vset.pattern.permute.xlu0 3
    %1359 = vperm.xlu0 %1358, %v61
    %v1360 = vpop.permute.xlu0 %1359
    %1362 = vset.pattern.permute.xlu0 3
    %1363 = vperm.xlu0 %1362, %v62
    %v1364 = vpop.permute.xlu0 %1363
    %1366 = vset.pattern.permute.xlu0 3
    %1367 = vperm.xlu0 %1366, %v63
    %v1368 = vpop.permute.xlu0 %1367
    %1370 = vset.pattern.permute.xlu0 3
    %1371 = vperm.xlu0 %1370, %v64
    %v1372 = vpop.permute.xlu0 %1371
    %1374 = vset.pattern.permute.xlu0 3
    %1375 = vperm.xlu0 %1374, %v65
    %v1376 = vpop.permute.xlu0 %1375
    %1378 = vset.pattern.permute.xlu0 3
    %1379 = vperm.xlu0 %1378, %v66
    %v1380 = vpop.permute.xlu0 %1379
    %1382 = vset.pattern.permute.xlu0 3
    %1383 = vperm.xlu0 %1382, %v67
    %v1384 = vpop.permute.xlu0 %1383
    %1386 = vset.pattern.permute.xlu0 3
    %1387 = vperm.xlu0 %1386, %v68
    %v1388 = vpop.permute.xlu0 %1387
    %1390 = vset.pattern.permute.xlu0 3
    %1391 = vperm.xlu0 %1390, %v69
    %v1392 = vpop.permute.xlu0 %1391
    %1394 = vset.pattern.permute.xlu0 3
    %1395 = vperm.xlu0 %1394, %v70
    %v1396 = vpop.permute.xlu0 %1395
    %1398 = vset.pattern.permute.xlu0 3
    %1399 = vperm.xlu0 %1398, %v71
    %v1400 = vpop.permute.xlu0 %1399
    %v1402 = vmul.f32 %v1261, %v1276
    %v1403 = vmul.f32 %v1265, %v1276
    %v1404 = vmul.f32 %v1261, %v1280
    %v1405 = vmul.f32 %v1265, %v1280
    %v1406 = vmul.f32 %v1261, %v1284
    %v1407 = vmul.f32 %v1265, %v1284
    %v1408 = vmul.f32 %v1261, %v1288
    %v1409 = vmul.f32 %v1265, %v1288
    %v1410 = vmul.f32 %v1261, %v1292
    %v1411 = vmul.f32 %v1265, %v1292
    %v1412 = vmul.f32 %v1261, %v1296
    %v1413 = vmul.f32 %v1265, %v1296
    %v1414 = vmul.f32 %v1261, %v1300
    %v1415 = vmul.f32 %v1265, %v1300
    %v1416 = vmul.f32 %v1261, %v1304
    %v1417 = vmul.f32 %v1265, %v1304
    %v1418 = vmul.f32 %v1261, %v1308
    %v1419 = vmul.f32 %v1265, %v1308
    %v1420 = vmul.f32 %v1261, %v1312
    %v1421 = vmul.f32 %v1265, %v1312
    %v1422 = vmul.f32 %v1261, %v1316
    %v1423 = vmul.f32 %v1265, %v1316
    %v1424 = vmul.f32 %v1261, %v1320
    %v1425 = vmul.f32 %v1265, %v1320
    %v1426 = vmul.f32 %v1261, %v1324
    %v1427 = vmul.f32 %v1265, %v1324
    %v1428 = vmul.f32 %v1261, %v1328
    %v1429 = vmul.f32 %v1265, %v1328
    %v1430 = vmul.f32 %v1261, %v1332
    %v1431 = vmul.f32 %v1265, %v1332
    %v1432 = vmul.f32 %v1261, %v1336
    %v1433 = vmul.f32 %v1265, %v1336
    %v1434 = vmul.f32 %v1261, %v1340
    %v1435 = vmul.f32 %v1265, %v1340
    %v1436 = vmul.f32 %v1261, %v1344
    %v1437 = vmul.f32 %v1265, %v1344
    %v1438 = vmul.f32 %v1261, %v1348
    %v1439 = vmul.f32 %v1265, %v1348
    %v1440 = vmul.f32 %v1261, %v1352
    %v1441 = vmul.f32 %v1265, %v1352
    %v1442 = vmul.f32 %v1261, %v1356
    %v1443 = vmul.f32 %v1265, %v1356
    %v1444 = vmul.f32 %v1261, %v1360
    %v1445 = vmul.f32 %v1265, %v1360
    %v1446 = vmul.f32 %v1261, %v1364
    %v1447 = vmul.f32 %v1265, %v1364
    %v1448 = vmul.f32 %v1261, %v1368
    %v1449 = vmul.f32 %v1265, %v1368
    %v1450 = vmul.f32 %v1261, %v1372
    %v1451 = vmul.f32 %v1265, %v1372
    %v1452 = vmul.f32 %v1261, %v1376
    %v1453 = vmul.f32 %v1265, %v1376
    %v1454 = vmul.f32 %v1261, %v1380
    %v1455 = vmul.f32 %v1265, %v1380
    %v1456 = vmul.f32 %v1261, %v1384
    %v1457 = vmul.f32 %v1265, %v1384
    %v1458 = vmul.f32 %v1261, %v1388
    %v1459 = vmul.f32 %v1265, %v1388
    %v1460 = vmul.f32 %v1261, %v1392
    %v1461 = vmul.f32 %v1265, %v1392
    %v1462 = vmul.f32 %v1261, %v1396
    %v1463 = vmul.f32 %v1265, %v1396
    %v1464 = vmul.f32 %v1261, %v1400
    %v1465 = vmul.f32 %v1265, %v1400
    %v1466 = vmul.f32 %v1269, %v1276
    %v1467 = vmul.f32 %v1273, %v1276
    %v1468 = vmul.f32 %v1269, %v1280
    %v1469 = vmul.f32 %v1273, %v1280
    %v1470 = vmul.f32 %v1269, %v1284
    %v1471 = vmul.f32 %v1273, %v1284
    %v1472 = vmul.f32 %v1269, %v1288
    %v1473 = vmul.f32 %v1273, %v1288
    %v1474 = vmul.f32 %v1269, %v1292
    %v1475 = vmul.f32 %v1273, %v1292
    %v1476 = vmul.f32 %v1269, %v1296
    %v1477 = vmul.f32 %v1273, %v1296
    %v1478 = vmul.f32 %v1269, %v1300
    %v1479 = vmul.f32 %v1273, %v1300
    %v1480 = vmul.f32 %v1269, %v1304
    %v1481 = vmul.f32 %v1273, %v1304
    %v1482 = vmul.f32 %v1269, %v1308
    %v1483 = vmul.f32 %v1273, %v1308
    %v1484 = vmul.f32 %v1269, %v1312
    %v1485 = vmul.f32 %v1273, %v1312
    %v1486 = vmul.f32 %v1269, %v1316
    %v1487 = vmul.f32 %v1273, %v1316
    %v1488 = vmul.f32 %v1269, %v1320
    %v1489 = vmul.f32 %v1273, %v1320
    %v1490 = vmul.f32 %v1269, %v1324
    %v1491 = vmul.f32 %v1273, %v1324
    %v1492 = vmul.f32 %v1269, %v1328
    %v1493 = vmul.f32 %v1273, %v1328
    %v1494 = vmul.f32 %v1269, %v1332
    %v1495 = vmul.f32 %v1273, %v1332
    %v1496 = vmul.f32 %v1269, %v1336
    %v1497 = vmul.f32 %v1273, %v1336
    %v1498 = vmul.f32 %v1269, %v1340
    %v1499 = vmul.f32 %v1273, %v1340
    %v1500 = vmul.f32 %v1269, %v1344
    %v1501 = vmul.f32 %v1273, %v1344
    %v1502 = vmul.f32 %v1269, %v1348
    %v1503 = vmul.f32 %v1273, %v1348
    %v1504 = vmul.f32 %v1269, %v1352
    %v1505 = vmul.f32 %v1273, %v1352
    %v1506 = vmul.f32 %v1269, %v1356
    %v1507 = vmul.f32 %v1273, %v1356
    %v1508 = vmul.f32 %v1269, %v1360
    %v1509 = vmul.f32 %v1273, %v1360
    %v1510 = vmul.f32 %v1269, %v1364
    %v1511 = vmul.f32 %v1273, %v1364
    %v1512 = vmul.f32 %v1269, %v1368
    %v1513 = vmul.f32 %v1273, %v1368
    %v1514 = vmul.f32 %v1269, %v1372
    %v1515 = vmul.f32 %v1273, %v1372
    %v1516 = vmul.f32 %v1269, %v1376
    %v1517 = vmul.f32 %v1273, %v1376
    %v1518 = vmul.f32 %v1269, %v1380
    %v1519 = vmul.f32 %v1273, %v1380
    %v1520 = vmul.f32 %v1269, %v1384
    %v1521 = vmul.f32 %v1273, %v1384
    %v1522 = vmul.f32 %v1269, %v1388
    %v1523 = vmul.f32 %v1273, %v1388
    %v1524 = vmul.f32 %v1269, %v1392
    %v1525 = vmul.f32 %v1273, %v1392
    %v1526 = vmul.f32 %v1269, %v1396
    %v1527 = vmul.f32 %v1273, %v1396
    %v1528 = vmul.f32 %v1269, %v1400
    %v1529 = vmul.f32 %v1273, %v1400
    %v1530 = vadd.f32 %v1110, %v1402
    %v1531 = vadd.f32 %v1111, %v1403
    %v1532 = vadd.f32 %v1112, %v1404
    %v1533 = vadd.f32 %v1113, %v1405
    %v1534 = vadd.f32 %v1114, %v1406
    %v1535 = vadd.f32 %v1115, %v1407
    %v1536 = vadd.f32 %v1116, %v1408
    %v1537 = vadd.f32 %v1117, %v1409
    %v1538 = vadd.f32 %v1118, %v1410
    %v1539 = vadd.f32 %v1119, %v1411
    %v1540 = vadd.f32 %v1120, %v1412
    %v1541 = vadd.f32 %v1121, %v1413
    %v1542 = vadd.f32 %v1122, %v1414
    %v1543 = vadd.f32 %v1123, %v1415
    %v1544 = vadd.f32 %v1124, %v1416
    %v1545 = vadd.f32 %v1125, %v1417
    %v1546 = vadd.f32 %v1126, %v1418
    %v1547 = vadd.f32 %v1127, %v1419
    %v1548 = vadd.f32 %v1128, %v1420
    %v1549 = vadd.f32 %v1129, %v1421
    %v1550 = vadd.f32 %v1130, %v1422
    %v1551 = vadd.f32 %v1131, %v1423
    %v1552 = vadd.f32 %v1132, %v1424
    %v1553 = vadd.f32 %v1133, %v1425
    %v1554 = vadd.f32 %v1134, %v1426
    %v1555 = vadd.f32 %v1135, %v1427
    %v1556 = vadd.f32 %v1136, %v1428
    %v1557 = vadd.f32 %v1137, %v1429
    %v1558 = vadd.f32 %v1138, %v1430
    %v1559 = vadd.f32 %v1139, %v1431
    %v1560 = vadd.f32 %v1140, %v1432
    %v1561 = vadd.f32 %v1141, %v1433
    %v1562 = vadd.f32 %v1142, %v1434
    %v1563 = vadd.f32 %v1143, %v1435
    %v1564 = vadd.f32 %v1144, %v1436
    %v1565 = vadd.f32 %v1145, %v1437
    %v1566 = vadd.f32 %v1146, %v1438
    %v1567 = vadd.f32 %v1147, %v1439
    %v1568 = vadd.f32 %v1148, %v1440
    %v1569 = vadd.f32 %v1149, %v1441
    %v1570 = vadd.f32 %v1150, %v1442
    %v1571 = vadd.f32 %v1151, %v1443
    %v1572 = vadd.f32 %v1152, %v1444
    %v1573 = vadd.f32 %v1153, %v1445
    %v1574 = vadd.f32 %v1154, %v1446
    %v1575 = vadd.f32 %v1155, %v1447
    %v1576 = vadd.f32 %v1156, %v1448
    %v1577 = vadd.f32 %v1157, %v1449
    %v1578 = vadd.f32 %v1158, %v1450
    %v1579 = vadd.f32 %v1159, %v1451
    %v1580 = vadd.f32 %v1160, %v1452
    %v1581 = vadd.f32 %v1161, %v1453
    %v1582 = vadd.f32 %v1162, %v1454
    %v1583 = vadd.f32 %v1163, %v1455
    %v1584 = vadd.f32 %v1164, %v1456
    %v1585 = vadd.f32 %v1165, %v1457
    %v1586 = vadd.f32 %v1166, %v1458
    %v1587 = vadd.f32 %v1167, %v1459
    %v1588 = vadd.f32 %v1168, %v1460
    %v1589 = vadd.f32 %v1169, %v1461
    %v1590 = vadd.f32 %v1170, %v1462
    %v1591 = vadd.f32 %v1171, %v1463
    %v1592 = vadd.f32 %v1172, %v1464
    %v1593 = vadd.f32 %v1173, %v1465
    %v1594 = vadd.f32 %v1174, %v1466
    %v1595 = vadd.f32 %v1175, %v1467
    %v1596 = vadd.f32 %v1176, %v1468
    %v1597 = vadd.f32 %v1177, %v1469
    %v1598 = vadd.f32 %v1178, %v1470
    %v1599 = vadd.f32 %v1179, %v1471
    %v1600 = vadd.f32 %v1180, %v1472
    %v1601 = vadd.f32 %v1181, %v1473
    %v1602 = vadd.f32 %v1182, %v1474
    %v1603 = vadd.f32 %v1183, %v1475
    %v1604 = vadd.f32 %v1184, %v1476
    %v1605 = vadd.f32 %v1185, %v1477
    %v1606 = vadd.f32 %v1186, %v1478
    %v1607 = vadd.f32 %v1187, %v1479
    %v1608 = vadd.f32 %v1188, %v1480
    %v1609 = vadd.f32 %v1189, %v1481
    %v1610 = vadd.f32 %v1190, %v1482
    %v1611 = vadd.f32 %v1191, %v1483
    %v1612 = vadd.f32 %v1192, %v1484
    %v1613 = vadd.f32 %v1193, %v1485
    %v1614 = vadd.f32 %v1194, %v1486
    %v1615 = vadd.f32 %v1195, %v1487
    %v1616 = vadd.f32 %v1196, %v1488
    %v1617 = vadd.f32 %v1197, %v1489
    %v1618 = vadd.f32 %v1198, %v1490
    %v1619 = vadd.f32 %v1199, %v1491
    %v1620 = vadd.f32 %v1200, %v1492
    %v1621 = vadd.f32 %v1201, %v1493
    %v1622 = vadd.f32 %v1202, %v1494
    %v1623 = vadd.f32 %v1203, %v1495
    %v1624 = vadd.f32 %v1204, %v1496
    %v1625 = vadd.f32 %v1205, %v1497
    %v1626 = vadd.f32 %v1206, %v1498
    %v1627 = vadd.f32 %v1207, %v1499
    %v1628 = vadd.f32 %v1208, %v1500
    %v1629 = vadd.f32 %v1209, %v1501
    %v1630 = vadd.f32 %v1210, %v1502
    %v1631 = vadd.f32 %v1211, %v1503
    %v1632 = vadd.f32 %v1212, %v1504
    %v1633 = vadd.f32 %v1213, %v1505
    %v1634 = vadd.f32 %v1214, %v1506
    %v1635 = vadd.f32 %v1215, %v1507
    %v1636 = vadd.f32 %v1216, %v1508
    %v1637 = vadd.f32 %v1217, %v1509
    %v1638 = vadd.f32 %v1218, %v1510
    %v1639 = vadd.f32 %v1219, %v1511
    %v1640 = vadd.f32 %v1220, %v1512
    %v1641 = vadd.f32 %v1221, %v1513
    %v1642 = vadd.f32 %v1222, %v1514
    %v1643 = vadd.f32 %v1223, %v1515
    %v1644 = vadd.f32 %v1224, %v1516
    %v1645 = vadd.f32 %v1225, %v1517
    %v1646 = vadd.f32 %v1226, %v1518
    %v1647 = vadd.f32 %v1227, %v1519
    %v1648 = vadd.f32 %v1228, %v1520
    %v1649 = vadd.f32 %v1229, %v1521
    %v1650 = vadd.f32 %v1230, %v1522
    %v1651 = vadd.f32 %v1231, %v1523
    %v1652 = vadd.f32 %v1232, %v1524
    %v1653 = vadd.f32 %v1233, %v1525
    %v1654 = vadd.f32 %v1234, %v1526
    %v1655 = vadd.f32 %v1235, %v1527
    %v1656 = vadd.f32 %v1236, %v1528
    %v1657 = vadd.f32 %v1237, %v1529
    %v1658 = vmax.f32 %v1530, 0.0
    %v1659 = vmax.f32 %v1531, 0.0
    %v1660 = vmax.f32 %v1532, 0.0
    %v1661 = vmax.f32 %v1533, 0.0
    %v1662 = vmax.f32 %v1534, 0.0
    %v1663 = vmax.f32 %v1535, 0.0
    %v1664 = vmax.f32 %v1536, 0.0
    %v1665 = vmax.f32 %v1537, 0.0
    %v1666 = vmax.f32 %v1538, 0.0
    %v1667 = vmax.f32 %v1539, 0.0
    %v1668 = vmax.f32 %v1540, 0.0
    %v1669 = vmax.f32 %v1541, 0.0
    %v1670 = vmax.f32 %v1542, 0.0
    %v1671 = vmax.f32 %v1543, 0.0
    %v1672 = vmax.f32 %v1544, 0.0
    %v1673 = vmax.f32 %v1545, 0.0
    %v1674 = vmax.f32 %v1546, 0.0
    %v1675 = vmax.f32 %v1547, 0.0
    %v1676 = vmax.f32 %v1548, 0.0
    %v1677 = vmax.f32 %v1549, 0.0
    %v1678 = vmax.f32 %v1550, 0.0
    %v1679 = vmax.f32 %v1551, 0.0
    %v1680 = vmax.f32 %v1552, 0.0
    %v1681 = vmax.f32 %v1553, 0.0
    %v1682 = vmax.f32 %v1554, 0.0
    %v1683 = vmax.f32 %v1555, 0.0
    %v1684 = vmax.f32 %v1556, 0.0
    %v1685 = vmax.f32 %v1557, 0.0
    %v1686 = vmax.f32 %v1558, 0.0
    %v1687 = vmax.f32 %v1559, 0.0
    %v1688 = vmax.f32 %v1560, 0.0
    %v1689 = vmax.f32 %v1561, 0.0
    %v1690 = vmax.f32 %v1562, 0.0
    %v1691 = vmax.f32 %v1563, 0.0
    %v1692 = vmax.f32 %v1564, 0.0
    %v1693 = vmax.f32 %v1565, 0.0
    %v1694 = vmax.f32 %v1566, 0.0
    %v1695 = vmax.f32 %v1567, 0.0
    %v1696 = vmax.f32 %v1568, 0.0
    %v1697 = vmax.f32 %v1569, 0.0
    %v1698 = vmax.f32 %v1570, 0.0
    %v1699 = vmax.f32 %v1571, 0.0
    %v1700 = vmax.f32 %v1572, 0.0
    %v1701 = vmax.f32 %v1573, 0.0
    %v1702 = vmax.f32 %v1574, 0.0
    %v1703 = vmax.f32 %v1575, 0.0
    %v1704 = vmax.f32 %v1576, 0.0
    %v1705 = vmax.f32 %v1577, 0.0
    %v1706 = vmax.f32 %v1578, 0.0
    %v1707 = vmax.f32 %v1579, 0.0
    %v1708 = vmax.f32 %v1580, 0.0
    %v1709 = vmax.f32 %v1581, 0.0
    %v1710 = vmax.f32 %v1582, 0.0
    %v1711 = vmax.f32 %v1583, 0.0
    %v1712 = vmax.f32 %v1584, 0.0
    %v1713 = vmax.f32 %v1585, 0.0
    %v1714 = vmax.f32 %v1586, 0.0
    %v1715 = vmax.f32 %v1587, 0.0
    %v1716 = vmax.f32 %v1588, 0.0
    %v1717 = vmax.f32 %v1589, 0.0
    %v1718 = vmax.f32 %v1590, 0.0
    %v1719 = vmax.f32 %v1591, 0.0
    %v1720 = vmax.f32 %v1592, 0.0
    %v1721 = vmax.f32 %v1593, 0.0
    %v1722 = vmax.f32 %v1594, 0.0
    %v1723 = vmax.f32 %v1595, 0.0
    %v1724 = vmax.f32 %v1596, 0.0
    %v1725 = vmax.f32 %v1597, 0.0
    %v1726 = vmax.f32 %v1598, 0.0
    %v1727 = vmax.f32 %v1599, 0.0
    %v1728 = vmax.f32 %v1600, 0.0
    %v1729 = vmax.f32 %v1601, 0.0
    %v1730 = vmax.f32 %v1602, 0.0
    %v1731 = vmax.f32 %v1603, 0.0
    %v1732 = vmax.f32 %v1604, 0.0
    %v1733 = vmax.f32 %v1605, 0.0
    %v1734 = vmax.f32 %v1606, 0.0
    %v1735 = vmax.f32 %v1607, 0.0
    %v1736 = vmax.f32 %v1608, 0.0
    %v1737 = vmax.f32 %v1609, 0.0
    %v1738 = vmax.f32 %v1610, 0.0
    %v1739 = vmax.f32 %v1611, 0.0
    %v1740 = vmax.f32 %v1612, 0.0
    %v1741 = vmax.f32 %v1613, 0.0
    %v1742 = vmax.f32 %v1614, 0.0
    %v1743 = vmax.f32 %v1615, 0.0
    %v1744 = vmax.f32 %v1616, 0.0
    %v1745 = vmax.f32 %v1617, 0.0
    %v1746 = vmax.f32 %v1618, 0.0
    %v1747 = vmax.f32 %v1619, 0.0
    %v1748 = vmax.f32 %v1620, 0.0
    %v1749 = vmax.f32 %v1621, 0.0
    %v1750 = vmax.f32 %v1622, 0.0
    %v1751 = vmax.f32 %v1623, 0.0
    %v1752 = vmax.f32 %v1624, 0.0
    %v1753 = vmax.f32 %v1625, 0.0
    %v1754 = vmax.f32 %v1626, 0.0
    %v1755 = vmax.f32 %v1627, 0.0
    %v1756 = vmax.f32 %v1628, 0.0
    %v1757 = vmax.f32 %v1629, 0.0
    %v1758 = vmax.f32 %v1630, 0.0
    %v1759 = vmax.f32 %v1631, 0.0
    %v1760 = vmax.f32 %v1632, 0.0
    %v1761 = vmax.f32 %v1633, 0.0
    %v1762 = vmax.f32 %v1634, 0.0
    %v1763 = vmax.f32 %v1635, 0.0
    %v1764 = vmax.f32 %v1636, 0.0
    %v1765 = vmax.f32 %v1637, 0.0
    %v1766 = vmax.f32 %v1638, 0.0
    %v1767 = vmax.f32 %v1639, 0.0
    %v1768 = vmax.f32 %v1640, 0.0
    %v1769 = vmax.f32 %v1641, 0.0
    %v1770 = vmax.f32 %v1642, 0.0
    %v1771 = vmax.f32 %v1643, 0.0
    %v1772 = vmax.f32 %v1644, 0.0
    %v1773 = vmax.f32 %v1645, 0.0
    %v1774 = vmax.f32 %v1646, 0.0
    %v1775 = vmax.f32 %v1647, 0.0
    %v1776 = vmax.f32 %v1648, 0.0
    %v1777 = vmax.f32 %v1649, 0.0
    %v1778 = vmax.f32 %v1650, 0.0
    %v1779 = vmax.f32 %v1651, 0.0
    %v1780 = vmax.f32 %v1652, 0.0
    %v1781 = vmax.f32 %v1653, 0.0
    %v1782 = vmax.f32 %v1654, 0.0
    %v1783 = vmax.f32 %v1655, 0.0
    %v1784 = vmax.f32 %v1656, 0.0
    %v1785 = vmax.f32 %v1657, 0.0
    %v1786 = vadd.f32 %v1658, %v1659
    %1787 = vadd.xlane.f32.xlu0 %v1786
    %v1788 = vpop.xlane.xlu0 %1787
    %v1789 = vadd.f32 %v1660, %v1661
    %1790 = vadd.xlane.f32.xlu0 %v1789
    %v1791 = vpop.xlane.xlu0 %1790
    %v1792 = vadd.f32 %v1662, %v1663
    %1793 = vadd.xlane.f32.xlu0 %v1792
    %v1794 = vpop.xlane.xlu0 %1793
    %v1795 = vadd.f32 %v1664, %v1665
    %1796 = vadd.xlane.f32.xlu0 %v1795
    %v1797 = vpop.xlane.xlu0 %1796
    %v1798 = vadd.f32 %v1666, %v1667
    %1799 = vadd.xlane.f32.xlu0 %v1798
    %v1800 = vpop.xlane.xlu0 %1799
    %v1801 = vadd.f32 %v1668, %v1669
    %1802 = vadd.xlane.f32.xlu0 %v1801
    %v1803 = vpop.xlane.xlu0 %1802
    %v1804 = vadd.f32 %v1670, %v1671
    %1805 = vadd.xlane.f32.xlu0 %v1804
    %v1806 = vpop.xlane.xlu0 %1805
    %v1807 = vadd.f32 %v1672, %v1673
    %1808 = vadd.xlane.f32.xlu0 %v1807
    %v1809 = vpop.xlane.xlu0 %1808
    %v1810 = vadd.f32 %v1674, %v1675
    %1811 = vadd.xlane.f32.xlu0 %v1810
    %v1812 = vpop.xlane.xlu0 %1811
    %v1813 = vadd.f32 %v1676, %v1677
    %1814 = vadd.xlane.f32.xlu0 %v1813
    %v1815 = vpop.xlane.xlu0 %1814
    %v1816 = vadd.f32 %v1678, %v1679
    %1817 = vadd.xlane.f32.xlu0 %v1816
    %v1818 = vpop.xlane.xlu0 %1817
    %v1819 = vadd.f32 %v1680, %v1681
    %1820 = vadd.xlane.f32.xlu0 %v1819
    %v1821 = vpop.xlane.xlu0 %1820
    %v1822 = vadd.f32 %v1682, %v1683
    %1823 = vadd.xlane.f32.xlu0 %v1822
    %v1824 = vpop.xlane.xlu0 %1823
    %v1825 = vadd.f32 %v1684, %v1685
    %1826 = vadd.xlane.f32.xlu0 %v1825
    %v1827 = vpop.xlane.xlu0 %1826
    %v1828 = vadd.f32 %v1686, %v1687
    %1829 = vadd.xlane.f32.xlu0 %v1828
    %v1830 = vpop.xlane.xlu0 %1829
    %v1831 = vadd.f32 %v1688, %v1689
    %1832 = vadd.xlane.f32.xlu0 %v1831
    %v1833 = vpop.xlane.xlu0 %1832
    %v1834 = vadd.f32 %v1690, %v1691
    %1835 = vadd.xlane.f32.xlu0 %v1834
    %v1836 = vpop.xlane.xlu0 %1835
    %v1837 = vadd.f32 %v1692, %v1693
    %1838 = vadd.xlane.f32.xlu0 %v1837
    %v1839 = vpop.xlane.xlu0 %1838
    %v1840 = vadd.f32 %v1694, %v1695
    %1841 = vadd.xlane.f32.xlu0 %v1840
    %v1842 = vpop.xlane.xlu0 %1841
    %v1843 = vadd.f32 %v1696, %v1697
    %1844 = vadd.xlane.f32.xlu0 %v1843
    %v1845 = vpop.xlane.xlu0 %1844
    %v1846 = vadd.f32 %v1698, %v1699
    %1847 = vadd.xlane.f32.xlu0 %v1846
    %v1848 = vpop.xlane.xlu0 %1847
    %v1849 = vadd.f32 %v1700, %v1701
    %1850 = vadd.xlane.f32.xlu0 %v1849
    %v1851 = vpop.xlane.xlu0 %1850
    %v1852 = vadd.f32 %v1702, %v1703
    %1853 = vadd.xlane.f32.xlu0 %v1852
    %v1854 = vpop.xlane.xlu0 %1853
    %v1855 = vadd.f32 %v1704, %v1705
    %1856 = vadd.xlane.f32.xlu0 %v1855
    %v1857 = vpop.xlane.xlu0 %1856
    %v1858 = vadd.f32 %v1706, %v1707
    %1859 = vadd.xlane.f32.xlu0 %v1858
    %v1860 = vpop.xlane.xlu0 %1859
    %v1861 = vadd.f32 %v1708, %v1709
    %1862 = vadd.xlane.f32.xlu0 %v1861
    %v1863 = vpop.xlane.xlu0 %1862
    %v1864 = vadd.f32 %v1710, %v1711
    %1865 = vadd.xlane.f32.xlu0 %v1864
    %v1866 = vpop.xlane.xlu0 %1865
    %v1867 = vadd.f32 %v1712, %v1713
    %1868 = vadd.xlane.f32.xlu0 %v1867
    %v1869 = vpop.xlane.xlu0 %1868
    %v1870 = vadd.f32 %v1714, %v1715
    %1871 = vadd.xlane.f32.xlu0 %v1870
    %v1872 = vpop.xlane.xlu0 %1871
    %v1873 = vadd.f32 %v1716, %v1717
    %1874 = vadd.xlane.f32.xlu0 %v1873
    %v1875 = vpop.xlane.xlu0 %1874
    %v1876 = vadd.f32 %v1718, %v1719
    %1877 = vadd.xlane.f32.xlu0 %v1876
    %v1878 = vpop.xlane.xlu0 %1877
    %v1879 = vadd.f32 %v1720, %v1721
    %1880 = vadd.xlane.f32.xlu0 %v1879
    %v1881 = vpop.xlane.xlu0 %1880
    %v1882 = vadd.f32 %v1722, %v1723
    %1883 = vadd.xlane.f32.xlu0 %v1882
    %v1884 = vpop.xlane.xlu0 %1883
    %v1885 = vadd.f32 %v1724, %v1725
    %1886 = vadd.xlane.f32.xlu0 %v1885
    %v1887 = vpop.xlane.xlu0 %1886
    %v1888 = vadd.f32 %v1726, %v1727
    %1889 = vadd.xlane.f32.xlu0 %v1888
    %v1890 = vpop.xlane.xlu0 %1889
    %v1891 = vadd.f32 %v1728, %v1729
    %1892 = vadd.xlane.f32.xlu0 %v1891
    %v1893 = vpop.xlane.xlu0 %1892
    %v1894 = vadd.f32 %v1730, %v1731
    %1895 = vadd.xlane.f32.xlu0 %v1894
    %v1896 = vpop.xlane.xlu0 %1895
    %v1897 = vadd.f32 %v1732, %v1733
    %1898 = vadd.xlane.f32.xlu0 %v1897
    %v1899 = vpop.xlane.xlu0 %1898
    %v1900 = vadd.f32 %v1734, %v1735
    %1901 = vadd.xlane.f32.xlu0 %v1900
    %v1902 = vpop.xlane.xlu0 %1901
    %v1903 = vadd.f32 %v1736, %v1737
    %1904 = vadd.xlane.f32.xlu0 %v1903
    %v1905 = vpop.xlane.xlu0 %1904
    %v1906 = vadd.f32 %v1738, %v1739
    %1907 = vadd.xlane.f32.xlu0 %v1906
    %v1908 = vpop.xlane.xlu0 %1907
    %v1909 = vadd.f32 %v1740, %v1741
    %1910 = vadd.xlane.f32.xlu0 %v1909
    %v1911 = vpop.xlane.xlu0 %1910
    %v1912 = vadd.f32 %v1742, %v1743
    %1913 = vadd.xlane.f32.xlu0 %v1912
    %v1914 = vpop.xlane.xlu0 %1913
    %v1915 = vadd.f32 %v1744, %v1745
    %1916 = vadd.xlane.f32.xlu0 %v1915
    %v1917 = vpop.xlane.xlu0 %1916
    %v1918 = vadd.f32 %v1746, %v1747
    %1919 = vadd.xlane.f32.xlu0 %v1918
    %v1920 = vpop.xlane.xlu0 %1919
    %v1921 = vadd.f32 %v1748, %v1749
    %1922 = vadd.xlane.f32.xlu0 %v1921
    %v1923 = vpop.xlane.xlu0 %1922
    %v1924 = vadd.f32 %v1750, %v1751
    %1925 = vadd.xlane.f32.xlu0 %v1924
    %v1926 = vpop.xlane.xlu0 %1925
    %v1927 = vadd.f32 %v1752, %v1753
    %1928 = vadd.xlane.f32.xlu0 %v1927
    %v1929 = vpop.xlane.xlu0 %1928
    %v1930 = vadd.f32 %v1754, %v1755
    %1931 = vadd.xlane.f32.xlu0 %v1930
    %v1932 = vpop.xlane.xlu0 %1931
    %v1933 = vadd.f32 %v1756, %v1757
    %1934 = vadd.xlane.f32.xlu0 %v1933
    %v1935 = vpop.xlane.xlu0 %1934
    %v1936 = vadd.f32 %v1758, %v1759
    %1937 = vadd.xlane.f32.xlu0 %v1936
    %v1938 = vpop.xlane.xlu0 %1937
    %v1939 = vadd.f32 %v1760, %v1761
    %1940 = vadd.xlane.f32.xlu0 %v1939
    %v1941 = vpop.xlane.xlu0 %1940
    %v1942 = vadd.f32 %v1762, %v1763
    %1943 = vadd.xlane.f32.xlu0 %v1942
    %v1944 = vpop.xlane.xlu0 %1943
    %v1945 = vadd.f32 %v1764, %v1765
    %1946 = vadd.xlane.f32.xlu0 %v1945
    %v1947 = vpop.xlane.xlu0 %1946
    %v1948 = vadd.f32 %v1766, %v1767
    %1949 = vadd.xlane.f32.xlu0 %v1948
    %v1950 = vpop.xlane.xlu0 %1949
    %v1951 = vadd.f32 %v1768, %v1769
    %1952 = vadd.xlane.f32.xlu0 %v1951
    %v1953 = vpop.xlane.xlu0 %1952
    %v1954 = vadd.f32 %v1770, %v1771
    %1955 = vadd.xlane.f32.xlu0 %v1954
    %v1956 = vpop.xlane.xlu0 %1955
    %v1957 = vadd.f32 %v1772, %v1773
    %1958 = vadd.xlane.f32.xlu0 %v1957
    %v1959 = vpop.xlane.xlu0 %1958
    %v1960 = vadd.f32 %v1774, %v1775
    %1961 = vadd.xlane.f32.xlu0 %v1960
    %v1962 = vpop.xlane.xlu0 %1961
    %v1963 = vadd.f32 %v1776, %v1777
    %1964 = vadd.xlane.f32.xlu0 %v1963
    %v1965 = vpop.xlane.xlu0 %1964
    %v1966 = vadd.f32 %v1778, %v1779
    %1967 = vadd.xlane.f32.xlu0 %v1966
    %v1968 = vpop.xlane.xlu0 %1967
    %v1969 = vadd.f32 %v1780, %v1781
    %1970 = vadd.xlane.f32.xlu0 %v1969
    %v1971 = vpop.xlane.xlu0 %1970
    %v1972 = vadd.f32 %v1782, %v1783
    %1973 = vadd.xlane.f32.xlu0 %v1972
    %v1974 = vpop.xlane.xlu0 %1973
    %v1975 = vadd.f32 %v1784, %v1785
    %1976 = vadd.xlane.f32.xlu0 %v1975
    %v1977 = vpop.xlane.xlu0 %1976
    %v1978 = vmul.f32 %v1788, 0.00390625
    %v1979 = vmul.f32 %v1791, 0.00390625
    %v1980 = vmul.f32 %v1794, 0.00390625
    %v1981 = vmul.f32 %v1797, 0.00390625
    %v1982 = vmul.f32 %v1800, 0.00390625
    %v1983 = vmul.f32 %v1803, 0.00390625
    %v1984 = vmul.f32 %v1806, 0.00390625
    %v1985 = vmul.f32 %v1809, 0.00390625
    %v1986 = vmul.f32 %v1812, 0.00390625
    %v1987 = vmul.f32 %v1815, 0.00390625
    %v1988 = vmul.f32 %v1818, 0.00390625
    %v1989 = vmul.f32 %v1821, 0.00390625
    %v1990 = vmul.f32 %v1824, 0.00390625
    %v1991 = vmul.f32 %v1827, 0.00390625
    %v1992 = vmul.f32 %v1830, 0.00390625
    %v1993 = vmul.f32 %v1833, 0.00390625
    %v1994 = vmul.f32 %v1836, 0.00390625
    %v1995 = vmul.f32 %v1839, 0.00390625
    %v1996 = vmul.f32 %v1842, 0.00390625
    %v1997 = vmul.f32 %v1845, 0.00390625
    %v1998 = vmul.f32 %v1848, 0.00390625
    %v1999 = vmul.f32 %v1851, 0.00390625
    %v2000 = vmul.f32 %v1854, 0.00390625
    %v2001 = vmul.f32 %v1857, 0.00390625
    %v2002 = vmul.f32 %v1860, 0.00390625
    %v2003 = vmul.f32 %v1863, 0.00390625
    %v2004 = vmul.f32 %v1866, 0.00390625
    %v2005 = vmul.f32 %v1869, 0.00390625
    %v2006 = vmul.f32 %v1872, 0.00390625
    %v2007 = vmul.f32 %v1875, 0.00390625
    %v2008 = vmul.f32 %v1878, 0.00390625
    %v2009 = vmul.f32 %v1881, 0.00390625
    %v2010 = vmul.f32 %v1884, 0.00390625
    %v2011 = vmul.f32 %v1887, 0.00390625
    %v2012 = vmul.f32 %v1890, 0.00390625
    %v2013 = vmul.f32 %v1893, 0.00390625
    %v2014 = vmul.f32 %v1896, 0.00390625
    %v2015 = vmul.f32 %v1899, 0.00390625
    %v2016 = vmul.f32 %v1902, 0.00390625
    %v2017 = vmul.f32 %v1905, 0.00390625
    %v2018 = vmul.f32 %v1908, 0.00390625
    %v2019 = vmul.f32 %v1911, 0.00390625
    %v2020 = vmul.f32 %v1914, 0.00390625
    %v2021 = vmul.f32 %v1917, 0.00390625
    %v2022 = vmul.f32 %v1920, 0.00390625
    %v2023 = vmul.f32 %v1923, 0.00390625
    %v2024 = vmul.f32 %v1926, 0.00390625
    %v2025 = vmul.f32 %v1929, 0.00390625
    %v2026 = vmul.f32 %v1932, 0.00390625
    %v2027 = vmul.f32 %v1935, 0.00390625
    %v2028 = vmul.f32 %v1938, 0.00390625
    %v2029 = vmul.f32 %v1941, 0.00390625
    %v2030 = vmul.f32 %v1944, 0.00390625
    %v2031 = vmul.f32 %v1947, 0.00390625
    %v2032 = vmul.f32 %v1950, 0.00390625
    %v2033 = vmul.f32 %v1953, 0.00390625
    %v2034 = vmul.f32 %v1956, 0.00390625
    %v2035 = vmul.f32 %v1959, 0.00390625
    %v2036 = vmul.f32 %v1962, 0.00390625
    %v2037 = vmul.f32 %v1965, 0.00390625
    %v2038 = vmul.f32 %v1968, 0.00390625
    %v2039 = vmul.f32 %v1971, 0.00390625
    %v2040 = vmul.f32 %v1974, 0.00390625
    %v2041 = vmul.f32 %v1977, 0.00390625
    %v2042 = vld [vmem:[%s2] sm:$0xff]
    %v2043 = vld [vmem:[%s2 + $0x8] sm:$0xff]
    %v2044 = vld [vmem:[%s2 + $0x10] sm:$0xff]
    %v2045 = vld [vmem:[%s2 + $0x18] sm:$0xff]
    %v2046 = vld [vmem:[%s2 + $0x20] sm:$0xff]
    %v2047 = vld [vmem:[%s2 + $0x28] sm:$0xff]
    %v2048 = vld [vmem:[%s2 + $0x30] sm:$0xff]
    %v2049 = vld [vmem:[%s2 + $0x38] sm:$0xff]
    %v2050 = vld [vmem:[%s2 + $0x40] sm:$0xff]
    %v2051 = vld [vmem:[%s2 + $0x48] sm:$0xff]
    %v2052 = vld [vmem:[%s2 + $0x50] sm:$0xff]
    %v2053 = vld [vmem:[%s2 + $0x58] sm:$0xff]
    %v2054 = vld [vmem:[%s2 + $0x60] sm:$0xff]
    %v2055 = vld [vmem:[%s2 + $0x68] sm:$0xff]
    %v2056 = vld [vmem:[%s2 + $0x70] sm:$0xff]
    %v2057 = vld [vmem:[%s2 + $0x78] sm:$0xff]
    %v2058 = vld [vmem:[%s2 + $0x80] sm:$0xff]
    %v2059 = vld [vmem:[%s2 + $0x88] sm:$0xff]
    %v2060 = vld [vmem:[%s2 + $0x90] sm:$0xff]
    %v2061 = vld [vmem:[%s2 + $0x98] sm:$0xff]
    %v2062 = vld [vmem:[%s2 + $0xa0] sm:$0xff]
    %v2063 = vld [vmem:[%s2 + $0xa8] sm:$0xff]
    %v2064 = vld [vmem:[%s2 + $0xb0] sm:$0xff]
    %v2065 = vld [vmem:[%s2 + $0xb8] sm:$0xff]
    %v2066 = vld [vmem:[%s2 + $0xc0] sm:$0xff]
    %v2067 = vld [vmem:[%s2 + $0xc8] sm:$0xff]
    %v2068 = vld [vmem:[%s2 + $0xd0] sm:$0xff]
    %v2069 = vld [vmem:[%s2 + $0xd8] sm:$0xff]
    %v2070 = vld [vmem:[%s2 + $0xe0] sm:$0xff]
    %v2071 = vld [vmem:[%s2 + $0xe8] sm:$0xff]
    %v2072 = vld [vmem:[%s2 + $0xf0] sm:$0xff]
    %v2073 = vld [vmem:[%s2 + $0xf8] sm:$0xff]
    %v2074 = vld [vmem:[%s3] sm:$0x1]
    %v2076 = vlaneseq
    %v2077 = vshrl.u32 %v2076, 7
    %v2078 = vsub.s32 0, %v2077
    %v2079 = vrot.slane %v2074, %v2078
    %v2145 = vlaneseq
    %v2146 = vand.u32 %v2145, 127
    %v2147 = vlaneseq
    %v2148 = vshrl.u32 %v2147, 7
    %v2149 = vsub.s32 %v2146, %v2148
    %v2150 = vrot.slane %v1978, %v2149
    %v2151 = vadd.s32 %v2146, 4294967288
    %v2152 = vlaneseq
    %v2153 = vshrl.u32 %v2152, 7
    %v2154 = vsub.s32 %v2151, %v2153
    %v2155 = vrot.slane %v1979, %v2154
    %vm2156 = vcmask 130112
    %v2157 = vsel %vm2156, %v2155, %v2150
    %v2158 = vadd.s32 %v2146, 4294967280
    %v2159 = vlaneseq
    %v2160 = vshrl.u32 %v2159, 7
    %v2161 = vsub.s32 %v2158, %v2160
    %v2162 = vrot.slane %v1980, %v2161
    %vm2163 = vcmask 195712
    %v2164 = vsel %vm2163, %v2162, %v2157
    %v2165 = vadd.s32 %v2146, 4294967272
    %v2166 = vlaneseq
    %v2167 = vshrl.u32 %v2166, 7
    %v2168 = vsub.s32 %v2165, %v2167
    %v2169 = vrot.slane %v1981, %v2168
    %vm2170 = vcmask 261312
    %v2171 = vsel %vm2170, %v2169, %v2164
    %v2172 = vadd.s32 %v2146, 4294967264
    %v2173 = vlaneseq
    %v2174 = vshrl.u32 %v2173, 7
    %v2175 = vsub.s32 %v2172, %v2174
    %v2176 = vrot.slane %v1982, %v2175
    %vm2177 = vcmask 326912
    %v2178 = vsel %vm2177, %v2176, %v2171
    %v2179 = vadd.s32 %v2146, 4294967256
    %v2180 = vlaneseq
    %v2181 = vshrl.u32 %v2180, 7
    %v2182 = vsub.s32 %v2179, %v2181
    %v2183 = vrot.slane %v1983, %v2182
    %vm2184 = vcmask 392512
    %v2185 = vsel %vm2184, %v2183, %v2178
    %v2186 = vadd.s32 %v2146, 4294967248
    %v2187 = vlaneseq
    %v2188 = vshrl.u32 %v2187, 7
    %v2189 = vsub.s32 %v2186, %v2188
    %v2190 = vrot.slane %v1984, %v2189
    %vm2191 = vcmask 458112
    %v2192 = vsel %vm2191, %v2190, %v2185
    %v2193 = vadd.s32 %v2146, 4294967240
    %v2194 = vlaneseq
    %v2195 = vshrl.u32 %v2194, 7
    %v2196 = vsub.s32 %v2193, %v2195
    %v2197 = vrot.slane %v1985, %v2196
    %vm2198 = vcmask 523712
    %v2199 = vsel %vm2198, %v2197, %v2192
    %v2200 = vadd.s32 %v2146, 4294967232
    %v2201 = vlaneseq
    %v2202 = vshrl.u32 %v2201, 7
    %v2203 = vsub.s32 %v2200, %v2202
    %v2204 = vrot.slane %v1986, %v2203
    %vm2205 = vcmask 589312
    %v2206 = vsel %vm2205, %v2204, %v2199
    %v2207 = vadd.s32 %v2146, 4294967224
    %v2208 = vlaneseq
    %v2209 = vshrl.u32 %v2208, 7
    %v2210 = vsub.s32 %v2207, %v2209
    %v2211 = vrot.slane %v1987, %v2210
    %vm2212 = vcmask 654912
    %v2213 = vsel %vm2212, %v2211, %v2206
    %v2214 = vadd.s32 %v2146, 4294967216
    %v2215 = vlaneseq
    %v2216 = vshrl.u32 %v2215, 7
    %v2217 = vsub.s32 %v2214, %v2216
    %v2218 = vrot.slane %v1988, %v2217
    %vm2219 = vcmask 720512
    %v2220 = vsel %vm2219, %v2218, %v2213
    %v2221 = vadd.s32 %v2146, 4294967208
    %v2222 = vlaneseq
    %v2223 = vshrl.u32 %v2222, 7
    %v2224 = vsub.s32 %v2221, %v2223
    %v2225 = vrot.slane %v1989, %v2224
    %vm2226 = vcmask 786112
    %v2227 = vsel %vm2226, %v2225, %v2220
    %v2228 = vadd.s32 %v2146, 4294967200
    %v2229 = vlaneseq
    %v2230 = vshrl.u32 %v2229, 7
    %v2231 = vsub.s32 %v2228, %v2230
    %v2232 = vrot.slane %v1990, %v2231
    %vm2233 = vcmask 851712
    %v2234 = vsel %vm2233, %v2232, %v2227
    %v2235 = vadd.s32 %v2146, 4294967192
    %v2236 = vlaneseq
    %v2237 = vshrl.u32 %v2236, 7
    %v2238 = vsub.s32 %v2235, %v2237
    %v2239 = vrot.slane %v1991, %v2238
    %vm2240 = vcmask 917312
    %v2241 = vsel %vm2240, %v2239, %v2234
    %v2242 = vadd.s32 %v2146, 4294967184
    %v2243 = vlaneseq
    %v2244 = vshrl.u32 %v2243, 7
    %v2245 = vsub.s32 %v2242, %v2244
    %v2246 = vrot.slane %v1992, %v2245
    %vm2247 = vcmask 982912
    %v2248 = vsel %vm2247, %v2246, %v2241
    %v2249 = vadd.s32 %v2146, 4294967176
    %v2250 = vlaneseq
    %v2251 = vshrl.u32 %v2250, 7
    %v2252 = vsub.s32 %v2249, %v2251
    %v2253 = vrot.slane %v1993, %v2252
    %vm2254 = vcmask 1048512
    %v2255 = vsel %vm2254, %v2253, %v2248
    %v2256 = vlaneseq
    %v2257 = vshrl.u32 %v2256, 7
    %v2258 = vsub.s32 %v2146, %v2257
    %v2259 = vrot.slane %v1994, %v2258
    %v2260 = vlaneseq
    %v2261 = vshrl.u32 %v2260, 7
    %v2262 = vsub.s32 %v2151, %v2261
    %v2263 = vrot.slane %v1995, %v2262
    %v2264 = vsel %vm2156, %v2263, %v2259
    %v2265 = vlaneseq
    %v2266 = vshrl.u32 %v2265, 7
    %v2267 = vsub.s32 %v2158, %v2266
    %v2268 = vrot.slane %v1996, %v2267
    %v2269 = vsel %vm2163, %v2268, %v2264
    %v2270 = vlaneseq
    %v2271 = vshrl.u32 %v2270, 7
    %v2272 = vsub.s32 %v2165, %v2271
    %v2273 = vrot.slane %v1997, %v2272
    %v2274 = vsel %vm2170, %v2273, %v2269
    %v2275 = vlaneseq
    %v2276 = vshrl.u32 %v2275, 7
    %v2277 = vsub.s32 %v2172, %v2276
    %v2278 = vrot.slane %v1998, %v2277
    %v2279 = vsel %vm2177, %v2278, %v2274
    %v2280 = vlaneseq
    %v2281 = vshrl.u32 %v2280, 7
    %v2282 = vsub.s32 %v2179, %v2281
    %v2283 = vrot.slane %v1999, %v2282
    %v2284 = vsel %vm2184, %v2283, %v2279
    %v2285 = vlaneseq
    %v2286 = vshrl.u32 %v2285, 7
    %v2287 = vsub.s32 %v2186, %v2286
    %v2288 = vrot.slane %v2000, %v2287
    %v2289 = vsel %vm2191, %v2288, %v2284
    %v2290 = vlaneseq
    %v2291 = vshrl.u32 %v2290, 7
    %v2292 = vsub.s32 %v2193, %v2291
    %v2293 = vrot.slane %v2001, %v2292
    %v2294 = vsel %vm2198, %v2293, %v2289
    %v2295 = vlaneseq
    %v2296 = vshrl.u32 %v2295, 7
    %v2297 = vsub.s32 %v2200, %v2296
    %v2298 = vrot.slane %v2002, %v2297
    %v2299 = vsel %vm2205, %v2298, %v2294
    %v2300 = vlaneseq
    %v2301 = vshrl.u32 %v2300, 7
    %v2302 = vsub.s32 %v2207, %v2301
    %v2303 = vrot.slane %v2003, %v2302
    %v2304 = vsel %vm2212, %v2303, %v2299
    %v2305 = vlaneseq
    %v2306 = vshrl.u32 %v2305, 7
    %v2307 = vsub.s32 %v2214, %v2306
    %v2308 = vrot.slane %v2004, %v2307
    %v2309 = vsel %vm2219, %v2308, %v2304
    %v2310 = vlaneseq
    %v2311 = vshrl.u32 %v2310, 7
    %v2312 = vsub.s32 %v2221, %v2311
    %v2313 = vrot.slane %v2005, %v2312
    %v2314 = vsel %vm2226, %v2313, %v2309
    %v2315 = vlaneseq
    %v2316 = vshrl.u32 %v2315, 7
    %v2317 = vsub.s32 %v2228, %v2316
    %v2318 = vrot.slane %v2006, %v2317
    %v2319 = vsel %vm2233, %v2318, %v2314
    %v2320 = vlaneseq
    %v2321 = vshrl.u32 %v2320, 7
    %v2322 = vsub.s32 %v2235, %v2321
    %v2323 = vrot.slane %v2007, %v2322
    %v2324 = vsel %vm2240, %v2323, %v2319
    %v2325 = vlaneseq
    %v2326 = vshrl.u32 %v2325, 7
    %v2327 = vsub.s32 %v2242, %v2326
    %v2328 = vrot.slane %v2008, %v2327
    %v2329 = vsel %vm2247, %v2328, %v2324
    %v2330 = vlaneseq
    %v2331 = vshrl.u32 %v2330, 7
    %v2332 = vsub.s32 %v2249, %v2331
    %v2333 = vrot.slane %v2009, %v2332
    %v2334 = vsel %vm2254, %v2333, %v2329
    %v2335 = vlaneseq
    %v2336 = vshrl.u32 %v2335, 7
    %v2337 = vsub.s32 %v2146, %v2336
    %v2338 = vrot.slane %v2010, %v2337
    %v2339 = vlaneseq
    %v2340 = vshrl.u32 %v2339, 7
    %v2341 = vsub.s32 %v2151, %v2340
    %v2342 = vrot.slane %v2011, %v2341
    %v2343 = vsel %vm2156, %v2342, %v2338
    %v2344 = vlaneseq
    %v2345 = vshrl.u32 %v2344, 7
    %v2346 = vsub.s32 %v2158, %v2345
    %v2347 = vrot.slane %v2012, %v2346
    %v2348 = vsel %vm2163, %v2347, %v2343
    %v2349 = vlaneseq
    %v2350 = vshrl.u32 %v2349, 7
    %v2351 = vsub.s32 %v2165, %v2350
    %v2352 = vrot.slane %v2013, %v2351
    %v2353 = vsel %vm2170, %v2352, %v2348
    %v2354 = vlaneseq
    %v2355 = vshrl.u32 %v2354, 7
    %v2356 = vsub.s32 %v2172, %v2355
    %v2357 = vrot.slane %v2014, %v2356
    %v2358 = vsel %vm2177, %v2357, %v2353
    %v2359 = vlaneseq
    %v2360 = vshrl.u32 %v2359, 7
    %v2361 = vsub.s32 %v2179, %v2360
    %v2362 = vrot.slane %v2015, %v2361
    %v2363 = vsel %vm2184, %v2362, %v2358
    %v2364 = vlaneseq
    %v2365 = vshrl.u32 %v2364, 7
    %v2366 = vsub.s32 %v2186, %v2365
    %v2367 = vrot.slane %v2016, %v2366
    %v2368 = vsel %vm2191, %v2367, %v2363
    %v2369 = vlaneseq
    %v2370 = vshrl.u32 %v2369, 7
    %v2371 = vsub.s32 %v2193, %v2370
    %v2372 = vrot.slane %v2017, %v2371
    %v2373 = vsel %vm2198, %v2372, %v2368
    %v2374 = vlaneseq
    %v2375 = vshrl.u32 %v2374, 7
    %v2376 = vsub.s32 %v2200, %v2375
    %v2377 = vrot.slane %v2018, %v2376
    %v2378 = vsel %vm2205, %v2377, %v2373
    %v2379 = vlaneseq
    %v2380 = vshrl.u32 %v2379, 7
    %v2381 = vsub.s32 %v2207, %v2380
    %v2382 = vrot.slane %v2019, %v2381
    %v2383 = vsel %vm2212, %v2382, %v2378
    %v2384 = vlaneseq
    %v2385 = vshrl.u32 %v2384, 7
    %v2386 = vsub.s32 %v2214, %v2385
    %v2387 = vrot.slane %v2020, %v2386
    %v2388 = vsel %vm2219, %v2387, %v2383
    %v2389 = vlaneseq
    %v2390 = vshrl.u32 %v2389, 7
    %v2391 = vsub.s32 %v2221, %v2390
    %v2392 = vrot.slane %v2021, %v2391
    %v2393 = vsel %vm2226, %v2392, %v2388
    %v2394 = vlaneseq
    %v2395 = vshrl.u32 %v2394, 7
    %v2396 = vsub.s32 %v2228, %v2395
    %v2397 = vrot.slane %v2022, %v2396
    %v2398 = vsel %vm2233, %v2397, %v2393
    %v2399 = vlaneseq
    %v2400 = vshrl.u32 %v2399, 7
    %v2401 = vsub.s32 %v2235, %v2400
    %v2402 = vrot.slane %v2023, %v2401
    %v2403 = vsel %vm2240, %v2402, %v2398
    %v2404 = vlaneseq
    %v2405 = vshrl.u32 %v2404, 7
    %v2406 = vsub.s32 %v2242, %v2405
    %v2407 = vrot.slane %v2024, %v2406
    %v2408 = vsel %vm2247, %v2407, %v2403
    %v2409 = vlaneseq
    %v2410 = vshrl.u32 %v2409, 7
    %v2411 = vsub.s32 %v2249, %v2410
    %v2412 = vrot.slane %v2025, %v2411
    %v2413 = vsel %vm2254, %v2412, %v2408
    %v2414 = vlaneseq
    %v2415 = vshrl.u32 %v2414, 7
    %v2416 = vsub.s32 %v2146, %v2415
    %v2417 = vrot.slane %v2026, %v2416
    %v2418 = vlaneseq
    %v2419 = vshrl.u32 %v2418, 7
    %v2420 = vsub.s32 %v2151, %v2419
    %v2421 = vrot.slane %v2027, %v2420
    %v2422 = vsel %vm2156, %v2421, %v2417
    %v2423 = vlaneseq
    %v2424 = vshrl.u32 %v2423, 7
    %v2425 = vsub.s32 %v2158, %v2424
    %v2426 = vrot.slane %v2028, %v2425
    %v2427 = vsel %vm2163, %v2426, %v2422
    %v2428 = vlaneseq
    %v2429 = vshrl.u32 %v2428, 7
    %v2430 = vsub.s32 %v2165, %v2429
    %v2431 = vrot.slane %v2029, %v2430
    %v2432 = vsel %vm2170, %v2431, %v2427
    %v2433 = vlaneseq
    %v2434 = vshrl.u32 %v2433, 7
    %v2435 = vsub.s32 %v2172, %v2434
    %v2436 = vrot.slane %v2030, %v2435
    %v2437 = vsel %vm2177, %v2436, %v2432
    %v2438 = vlaneseq
    %v2439 = vshrl.u32 %v2438, 7
    %v2440 = vsub.s32 %v2179, %v2439
    %v2441 = vrot.slane %v2031, %v2440
    %v2442 = vsel %vm2184, %v2441, %v2437
    %v2443 = vlaneseq
    %v2444 = vshrl.u32 %v2443, 7
    %v2445 = vsub.s32 %v2186, %v2444
    %v2446 = vrot.slane %v2032, %v2445
    %v2447 = vsel %vm2191, %v2446, %v2442
    %v2448 = vlaneseq
    %v2449 = vshrl.u32 %v2448, 7
    %v2450 = vsub.s32 %v2193, %v2449
    %v2451 = vrot.slane %v2033, %v2450
    %v2452 = vsel %vm2198, %v2451, %v2447
    %v2453 = vlaneseq
    %v2454 = vshrl.u32 %v2453, 7
    %v2455 = vsub.s32 %v2200, %v2454
    %v2456 = vrot.slane %v2034, %v2455
    %v2457 = vsel %vm2205, %v2456, %v2452
    %v2458 = vlaneseq
    %v2459 = vshrl.u32 %v2458, 7
    %v2460 = vsub.s32 %v2207, %v2459
    %v2461 = vrot.slane %v2035, %v2460
    %v2462 = vsel %vm2212, %v2461, %v2457
    %v2463 = vlaneseq
    %v2464 = vshrl.u32 %v2463, 7
    %v2465 = vsub.s32 %v2214, %v2464
    %v2466 = vrot.slane %v2036, %v2465
    %v2467 = vsel %vm2219, %v2466, %v2462
    %v2468 = vlaneseq
    %v2469 = vshrl.u32 %v2468, 7
    %v2470 = vsub.s32 %v2221, %v2469
    %v2471 = vrot.slane %v2037, %v2470
    %v2472 = vsel %vm2226, %v2471, %v2467
    %v2473 = vlaneseq
    %v2474 = vshrl.u32 %v2473, 7
    %v2475 = vsub.s32 %v2228, %v2474
    %v2476 = vrot.slane %v2038, %v2475
    %v2477 = vsel %vm2233, %v2476, %v2472
    %v2478 = vlaneseq
    %v2479 = vshrl.u32 %v2478, 7
    %v2480 = vsub.s32 %v2235, %v2479
    %v2481 = vrot.slane %v2039, %v2480
    %v2482 = vsel %vm2240, %v2481, %v2477
    %v2483 = vlaneseq
    %v2484 = vshrl.u32 %v2483, 7
    %v2485 = vsub.s32 %v2242, %v2484
    %v2486 = vrot.slane %v2040, %v2485
    %v2487 = vsel %vm2247, %v2486, %v2482
    %v2488 = vlaneseq
    %v2489 = vshrl.u32 %v2488, 7
    %v2490 = vsub.s32 %v2249, %v2489
    %v2491 = vrot.slane %v2041, %v2490
    %v2492 = vsel %vm2254, %v2491, %v2487
    %vm2493 = vcmask 1041409
    %v2494 = vsel %vm2493, %v2413, %v2255
    %v2495 = vsel %vm2493, %v2492, %v2334
    %2498 = vmatprep.subr.mxu0 0.0
    %2499 = vmatpush1.msra.mxu0 %v2057
    %2500 = vmatprep.subr.mxu0 0.0
    %2501 = vmatpush1.msra.mxu0 %v2056
    %2502 = vmatprep.subr.mxu0 0.0
    %2503 = vmatpush1.msra.mxu0 %v2055
    %2504 = vmatprep.subr.mxu0 0.0
    %2505 = vmatpush1.msra.mxu0 %v2054
    %2506 = vmatprep.subr.mxu0 0.0
    %2507 = vmatpush1.msra.mxu0 %v2053
    %2508 = vmatprep.subr.mxu0 0.0
    %2509 = vmatpush1.msra.mxu0 %v2052
    %2510 = vmatprep.subr.mxu0 0.0
    %2511 = vmatpush1.msra.mxu0 %v2051
    %2512 = vmatprep.subr.mxu0 0.0
    %2513 = vmatpush1.msra.mxu0 %v2050
    %2514 = vmatprep.subr.mxu0 0.0
    %2515 = vmatpush1.msra.mxu0 %v2049
    %2516 = vmatprep.subr.mxu0 0.0
    %2517 = vmatpush1.msra.mxu0 %v2048
    %2518 = vmatprep.subr.mxu0 0.0
    %2519 = vmatpush1.msra.mxu0 %v2047
    %2520 = vmatprep.subr.mxu0 0.0
    %2521 = vmatpush1.msra.mxu0 %v2046
    %2522 = vmatprep.subr.mxu0 0.0
    %2523 = vmatpush1.msra.mxu0 %v2045
    %2524 = vmatprep.subr.mxu0 0.0
    %2525 = vmatpush1.msra.mxu0 %v2044
    %2526 = vmatprep.subr.mxu0 0.0
    %2527 = vmatpush1.msra.mxu0 %v2043
    %2528 = vmatprep.subr.mxu0 0.0
    %2529 = vmatpush1.msra.mxu0 %v2042
    %2530 = vmatprep.subr.mxu0 0.0
    %2531 = vmatpush2.msra.mxu0 %v2073
    %2532 = vmatprep.subr.mxu0 0.0
    %2533 = vmatpush2.msra.mxu0 %v2072
    %2534 = vmatprep.subr.mxu0 0.0
    %2535 = vmatpush2.msra.mxu0 %v2071
    %2536 = vmatprep.subr.mxu0 0.0
    %2537 = vmatpush2.msra.mxu0 %v2070
    %2538 = vmatprep.subr.mxu0 0.0
    %2539 = vmatpush2.msra.mxu0 %v2069
    %2540 = vmatprep.subr.mxu0 0.0
    %2541 = vmatpush2.msra.mxu0 %v2068
    %2542 = vmatprep.subr.mxu0 0.0
    %2543 = vmatpush2.msra.mxu0 %v2067
    %2544 = vmatprep.subr.mxu0 0.0
    %2545 = vmatpush2.msra.mxu0 %v2066
    %2546 = vmatprep.subr.mxu0 0.0
    %2547 = vmatpush2.msra.mxu0 %v2065
    %2548 = vmatprep.subr.mxu0 0.0
    %2549 = vmatpush2.msra.mxu0 %v2064
    %2550 = vmatprep.subr.mxu0 0.0
    %2551 = vmatpush2.msra.mxu0 %v2063
    %2552 = vmatprep.subr.mxu0 0.0
    %2553 = vmatpush2.msra.mxu0 %v2062
    %2554 = vmatprep.subr.mxu0 0.0
    %2555 = vmatpush2.msra.mxu0 %v2061
    %2556 = vmatprep.subr.mxu0 0.0
    %2557 = vmatpush2.msra.mxu0 %v2060
    %2558 = vmatprep.subr.mxu0 0.0
    %2559 = vmatpush2.msra.mxu0 %v2059
    %2560 = vmatprep.subr.mxu0 0.0
    %2561 = vmatpush2.msra.mxu0 %v2058
    %2562 = vmatprep.mubr.f32.mxu0 %v2495
    %2563 = vmatmul.mubr.f32.gmra.mxu0 %v2494
    %v2564 = vpop.f32.mrf.mxu0
    %v2565 = vadd.f32 %v2079, %v2564
    %v2566 = vpop.f32.mrf.mxu0
    %2567 = vdwg.mxu0
    %vm2568 = vcmask 1041408
    %v2569 = vsel %vm2568, %v2565, 0.0
    %v2570 = vrot.slane %v2569, 4
    %v2571 = vadd.f32 %v2569, %v2570
    %v2572 = vrot.slane %v2571, 2
    %v2573 = vadd.f32 %v2571, %v2572
    %v2574 = vrot.slane %v2573, 1
    %v2575 = vadd.f32 %v2573, %v2574
    %v2576 = vrcp.pop 2.0
    %v2577 = vmul.f32 %v2575, %v2576
    %v2578 = vsub.f32 %v2565, %v2577
    %v2579 = vmul.f32 %v2578, %v2578
    %v2580 = vsel %vm2568, %v2579, 0.0
    %v2581 = vrot.slane %v2580, 4
    %v2582 = vadd.f32 %v2580, %v2581
    %v2583 = vrot.slane %v2582, 2
    %v2584 = vadd.f32 %v2582, %v2583
    %v2585 = vrot.slane %v2584, 1
    %v2586 = vadd.f32 %v2584, %v2585
    %v2587 = vmul.f32 %v2586, %v2576
    %v2588 = vadd.f32 %v2587, 1e-05
    %v2589 = vrsqrt.pop %v2588
    %v2590 = vmul.f32 %v2578, %v2589
    %v2591 = vld [vmem:[%s4] sm:$0x1]
    %v2593 = vlaneseq
    %v2594 = vshrl.u32 %v2593, 7
    %v2595 = vsub.s32 0, %v2594
    %v2596 = vrot.slane %v2591, %v2595
    %v2598 = vmul.f32 %v2596, %v2590
    %v2599 = vld [vmem:[%s5] sm:$0x1]
    %v2601 = vlaneseq
    %v2602 = vshrl.u32 %v2601, 7
    %v2603 = vsub.s32 0, %v2602
    %v2604 = vrot.slane %v2599, %v2603
    %v2606 = vadd.f32 %v2598, %v2604
    %2607 = vst [vmem:[#allocation5] sm:$0x3] %v2606
    // Predicated region
    $region30: #{tpu_custom_call.1} parent=1 // pred_check
      _
    $region31: #{tpu_custom_call.1} parent=1 // pred_check_branch
      %2609 = sbr.rel (0) target = $region33
    $region32: #{tpu_custom_call.1} parent=1 // pred_region
      %s2611 = ssub.s32 32, 32
      %2612 = vsyncadd [#allocation4], %s2611
      %s2614 = sshll.u32 [#allocation5], 4
      %s2615 = int_to_ptr.vmem [resolvable:$true] %s2614
      %2617 = dma.vmem_to_hbm [thread:$0]  %s2615, 32, %s6, [#allocation4]
    $region33: #{tpu_custom_call.1} parent=1 // pred_fallthru
      _
    // Predicated region
    $region34: #{tpu_custom_call.1} parent=1 // pred_check
      _
    $region35: #{tpu_custom_call.1} parent=1 // pred_check_branch
      %2619 = sbr.rel (0) target = $region37
    $region36: #{tpu_custom_call.1} parent=1 // pred_region
      %2620 = dma.done [#allocation4], 32
    $region37: #{tpu_custom_call.1} parent=1 // pred_fallthru
      _
    %2621 = vsyncpa [#allocation3], 1
    %2622 = vsyncpa [#allocation4], 1

</llo_original>
